<compile_context>
chip_gen: v5e
topology: v5e:2x2
jax: 0.10.0
libtpu: 0.0.40
codegen_flags: <defaults>
</compile_context>

<pallas_src>
import jax
import jax.numpy as jnp
from jax import lax
from jax.experimental import pallas as pl
from jax.experimental.pallas import tpu as pltpu

FDIM = 16                                      # Block(Fdim=16)
RMS_EPS = float(jnp.finfo(jnp.float32).eps)    # torch.nn.RMSNorm default eps
_F32_MAX = float(jnp.finfo(jnp.float32).max)

_VMEM = pl.BlockSpec(memory_space=pltpu.MemorySpace.VMEM)


# ----------------------------- in-kernel helpers -----------------------------

def _leaky(x, slope):
    return jnp.where(x >= 0.0, x, slope * x)


def _bn(x, g, b):
    # torch.nn.BatchNorm1d, training-mode batch statistics (biased var, eps 1e-5)
    mu = jnp.mean(x, axis=0, keepdims=True)
    var = jnp.mean(jnp.square(x - mu), axis=0, keepdims=True)
    return (x - mu) * lax.rsqrt(var + 1e-5) * g + b


def _nan_to_num(x):
    # torch.nan_to_num(x, nan=0.0): nan->0, +inf->f32max, -inf->f32min
    x = jnp.where(jnp.isnan(x), jnp.float32(0.0), x)
    return jnp.clip(x, -_F32_MAX, _F32_MAX)


# ------------------------------ the fused kernel ------------------------------

def _block_kernel(*refs):
    (x_s_ref, x_t_ref, x_e_ref, x_u_ref,
     oh_src_ref, oh_srcT_ref, oh_tgt_ref, oh_tgtT_ref, cnt_src_ref,
     # EdgeModel: MLP(4F,4F,F) + BatchNorm(F)
     e_w1_ref, e_b1_ref, e_w2_ref, e_b2_ref, e_g_ref, e_bb_ref,
     # SModel: MLP(2F,2F,2F), MLP(10F,10F,F) + BatchNorm(F)
     s1_w1_ref, s1_b1_ref, s1_w2_ref, s1_b2_ref,
     s2_w1_ref, s2_b1_ref, s2_w2_ref, s2_b2_ref, s_g_ref, s_bb_ref,
     # TModel: MLP(2F,2F,2F), MLP(4F,4F,F) + BatchNorm(F)
     t1_w1_ref, t1_b1_ref, t1_w2_ref, t1_b2_ref,
     t2_w1_ref, t2_b1_ref, t2_w2_ref, t2_b2_ref, t_g_ref, t_bb_ref,
     # GlobalModel: MLP(3F,3F,F) + RMSNorm(F)
     g_w1_ref, g_b1_ref, g_w2_ref, g_b2_ref, g_rms_ref,
     # outputs
     xs_out_ref, xt_out_ref, xe_out_ref, xu_out_ref) = refs

    f = x_s_ref.shape[1]
    dot = lambda a, b: jnp.dot(a, b, preferred_element_type=jnp.float32)

    x_s = x_s_ref[...]
    x_t = x_t_ref[...]
    x_e = x_e_ref[...]
    x_u = x_u_ref[...]
    oh_src = oh_src_ref[...]          # (E, S) one-hot, built once per forward
    oh_srcT = oh_srcT_ref[...]        # (S, E)
    oh_tgt = oh_tgt_ref[...]          # (E, T)
    oh_tgtT = oh_tgtT_ref[...]        # (T, E)
    denom = jnp.maximum(cnt_src_ref[...], 1.0)   # torch_scatter 'mean' clamps count to 1

    # Gathers via one-hot matmul (MXU); hoisted and reused below.
    xs_src = dot(oh_src, x_s)         # x_s[src]  (E, F)
    xt_tgt = dot(oh_tgt, x_t)         # x_t[tgt]  (E, F)

    # -------------------------------- EdgeModel --------------------------------
    # cat([x_s[src], x_t[tgt], x_e, u]) @ W1 fused as row-slab partial matmuls.
    e_w1 = e_w1_ref[...]
    h = (dot(xs_src, e_w1[0 * f:1 * f]) +
         dot(xt_tgt, e_w1[1 * f:2 * f]) +
         dot(x_e,    e_w1[2 * f:3 * f]) +
         (dot(x_u,   e_w1[3 * f:4 * f]) + e_b1_ref[...]))     # (1, 4F) broadcast row
    h = _leaky(h, 0.1)
    x_e_new = dot(h, e_w2_ref[...]) + e_b2_ref[...]
    x_e_new = _bn(x_e_new, e_g_ref[...], e_bb_ref[...])

    # --------------------------------- SModel ----------------------------------
    s1_w1 = s1_w1_ref[...]
    h = (dot(xt_tgt,  s1_w1[0 * f:1 * f]) +
         dot(x_e_new, s1_w1[1 * f:2 * f]) + s1_b1_ref[...])
    h = _leaky(h, 0.1)
    msg = dot(h, s1_w2_ref[...]) + s1_b2_ref[...]             # (E, 2F)

    sum1 = dot(oh_srcT, msg)                                  # scatter-sum by src
    sum2 = dot(oh_srcT, msg * msg)
    mean = sum1 / denom
    var = _leaky(sum2 / denom - mean * mean, 0.01)            # F.leaky_relu default slope
    std = jnp.sqrt(var + 1e-6)

    d = msg - dot(oh_src, mean)                               # msg - mean[src]
    d2 = d * d
    sum3 = dot(oh_srcT, d2 * d)
    sum4 = dot(oh_srcT, d2 * d2)
    std3 = std * std * std
    skew = (sum3 / denom) / std3
    kurt = (sum4 / denom) / (std3 * std)

    mean = _nan_to_num(mean)
    var = _nan_to_num(var)
    std = jnp.sqrt(var + 1e-6)
    skew = _nan_to_num(skew)
    kurt = _nan_to_num(kurt)

    s2_w1 = s2_w1_ref[...]
    h = (dot(x_s,  s2_w1[0 * f:1 * f]) +
         dot(mean, s2_w1[1 * f:3 * f]) +
         dot(std,  s2_w1[3 * f:5 * f]) +
         dot(skew, s2_w1[5 * f:7 * f]) +
         dot(kurt, s2_w1[7 * f:9 * f]) +
         (dot(x_u, s2_w1[9 * f:10 * f]) + s2_b1_ref[...]))
    h = _leaky(h, 0.1)
    x_s_new = dot(h, s2_w2_ref[...]) + s2_b2_ref[...]
    x_s_new = _bn(x_s_new, s_g_ref[...], s_bb_ref[...])

    # --------------------------------- TModel ----------------------------------
    xs_new_src = dot(oh_src, x_s_new)                         # updated x_s[src]
    t1_w1 = t1_w1_ref[...]
    h = (dot(xs_new_src, t1_w1[0 * f:1 * f]) +
         dot(x_e_new,    t1_w1[1 * f:2 * f]) + t1_b1_ref[...])
    h = _leaky(h, 0.1)
    msg_t = dot(h, t1_w2_ref[...]) + t1_b2_ref[...]           # (E, 2F)
    agg = dot(oh_tgtT, msg_t)                                 # scatter 'sum' -> (T, 2F)

    t2_w1 = t2_w1_ref[...]
    h = (dot(x_t,  t2_w1[0 * f:1 * f]) +
         dot(agg,  t2_w1[1 * f:3 * f]) +
         (dot(x_u, t2_w1[3 * f:4 * f]) + t2_b1_ref[...]))
    h = _leaky(h, 0.1)
    x_t_new = dot(h, t2_w2_ref[...]) + t2_b2_ref[...]
    x_t_new = _bn(x_t_new, t_g_ref[...], t_bb_ref[...])

    # ------------------------------- GlobalModel -------------------------------
    s_mean = jnp.mean(x_s_new, axis=0, keepdims=True)         # (1, F)
    t_mean = jnp.mean(x_t_new, axis=0, keepdims=True)
    g_w1 = g_w1_ref[...]
    h = (dot(x_u,    g_w1[0 * f:1 * f]) +
         dot(s_mean, g_w1[1 * f:2 * f]) +
         dot(t_mean, g_w1[2 * f:3 * f]) + g_b1_ref[...])
    h = _leaky(h, 0.1)
    x_u_new = dot(h, g_w2_ref[...]) + g_b2_ref[...]
    ms = jnp.mean(x_u_new * x_u_new, axis=-1, keepdims=True)
    x_u_new = x_u_new * lax.rsqrt(ms + RMS_EPS) * g_rms_ref[...]

    xs_out_ref[...] = x_s_new
    xt_out_ref[...] = x_t_new
    xe_out_ref[...] = x_e_new
    xu_out_ref[...] = x_u_new


# ------------------------------ parameter creation -----------------------------

def init_linear(key, d_in, d_out):
    k1, k2 = jax.random.split(key)
    bound = 1.0 / float(d_in) ** 0.5          # torch.nn.Linear default init range
    w = jax.random.uniform(k1, (d_in, d_out), jnp.float32, -bound, bound)
    b = jax.random.uniform(k2, (1, d_out), jnp.float32, -bound, bound)
    return w, b


def init_mlp(key, d1, d2, d3):
    k1, k2 = jax.random.split(key)
    w1, b1 = init_linear(k1, d1, d2)
    w2, b2 = init_linear(k2, d2, d3)
    return (w1, b1, w2, b2)


def init_block(key, fdim=FDIM):
    ks = jax.random.split(key, 6)
    fm = 2 * fdim
    ones = jnp.ones((1, fdim), jnp.float32)
    zeros = jnp.zeros((1, fdim), jnp.float32)
    return {
        "edge_mlp": init_mlp(ks[0], 4 * fdim, 4 * fdim, fdim),
        "edge_bn": (ones, zeros),
        "s_mlp1": init_mlp(ks[1], fm, fm, fm),
        "s_mlp2": init_mlp(ks[2], 4 * fm + 2 * fdim, 4 * fm + 2 * fdim, fdim),
        "s_bn": (ones, zeros),
        "t_mlp1": init_mlp(ks[3], fm, fm, fm),
        "t_mlp2": init_mlp(ks[4], 4 * fdim, 4 * fdim, fdim),
        "t_bn": (ones, zeros),
        "g_mlp": init_mlp(ks[5], 3 * fdim, 3 * fdim, fdim),
        "g_rms": ones,
    }


def _flatten_params(p):
    return (list(p["edge_mlp"]) + list(p["edge_bn"]) +
            list(p["s_mlp1"]) + list(p["s_mlp2"]) + list(p["s_bn"]) +
            list(p["t_mlp1"]) + list(p["t_mlp2"]) + list(p["t_bn"]) +
            list(p["g_mlp"]) + [p["g_rms"]])


# --------------------------------- forward ------------------------------------

@jax.jit
def block_forward(params, edge_index, x_s, x_t, x_e, x_u):
    """Block.forward: returns updated (x_s, x_t, x_e, x_u). edge_index unchanged."""
    s, fdim = x_s.shape
    t = x_t.shape[0]
    e = x_e.shape[0]
    src = edge_index[0].astype(jnp.int32)
    tgt = edge_index[1].astype(jnp.int32)

    # One-hot gather/scatter operators + segment counts: built ONCE per forward,
    # reused by every gather / scatter inside the single fused kernel.
    oh_src = (src[:, None] == jnp.arange(s, dtype=jnp.int32)[None, :]).astype(jnp.float32)
    oh_tgt = (tgt[:, None] == jnp.arange(t, dtype=jnp.int32)[None, :]).astype(jnp.float32)
    cnt_src = jnp.sum(oh_src, axis=0).reshape(s, 1)

    flat_w = _flatten_params(params)
    n_in = 9 + len(flat_w)

    # TODO(synk): BatchNorm1d running-stat buffers (running_mean/var) are not
    # updated (training-mode batch statistics only); eval-mode BN not modeled.
    return pl.pallas_call(
        _block_kernel,
        out_shape=(jax.ShapeDtypeStruct((s, fdim), jnp.float32),
                   jax.ShapeDtypeStruct((t, fdim), jnp.float32),
                   jax.ShapeDtypeStruct((e, fdim), jnp.float32),
                   jax.ShapeDtypeStruct((1, fdim), jnp.float32)),
        in_specs=[_VMEM] * n_in,
        out_specs=(_VMEM, _VMEM, _VMEM, _VMEM),
    )(x_s, x_t, x_e, x_u, oh_src, oh_src.T, oh_tgt, oh_tgt.T, cnt_src, *flat_w)


if __name__ == "__main__":
    key = jax.random.PRNGKey(0)
    kp, kd = jax.random.split(key)
    params = init_block(kp, FDIM)

    S, T, E = 8, 6, 24
    kk = jax.random.split(kd, 6)
    x_s = jax.random.normal(kk[0], (S, FDIM), jnp.float32)
    x_t = jax.random.normal(kk[1], (T, FDIM), jnp.float32)
    x_e = jax.random.normal(kk[2], (E, FDIM), jnp.float32)
    x_u = jax.random.normal(kk[3], (1, FDIM), jnp.float32)
    # every source and target node gets at least one incident edge
    src = jnp.concatenate(
        [jnp.arange(S), jax.random.randint(kk[4], (E - S,), 0, S)]).astype(jnp.int32)
    tgt = jnp.concatenate(
        [jnp.arange(T), jax.random.randint(kk[5], (E - T,), 0, T)]).astype(jnp.int32)
    edge_index = jnp.stack([src, tgt])

    out = block_forward(params, edge_index, x_s, x_t, x_e, x_u)
    jax.block_until_ready(out)
    print("KERNEL_OK")
</pallas_src>

<mosaic_0001>
module attributes {stable_mosaic.version = 11 : i64} {
  func.func @_block_kernel(%arg0: memref<8x16xf32, #tpu.memory_space<vmem>>, %arg1: memref<6x16xf32, #tpu.memory_space<vmem>>, %arg2: memref<24x16xf32, #tpu.memory_space<vmem>>, %arg3: memref<1x16xf32, #tpu.memory_space<vmem>>, %arg4: memref<24x8xf32, #tpu.memory_space<vmem>>, %arg5: memref<8x24xf32, #tpu.memory_space<vmem>>, %arg6: memref<24x6xf32, #tpu.memory_space<vmem>>, %arg7: memref<6x24xf32, #tpu.memory_space<vmem>>, %arg8: memref<8x1xf32, #tpu.memory_space<vmem>>, %arg9: memref<64x64xf32, #tpu.memory_space<vmem>>, %arg10: memref<1x64xf32, #tpu.memory_space<vmem>>, %arg11: memref<64x16xf32, #tpu.memory_space<vmem>>, %arg12: memref<1x16xf32, #tpu.memory_space<vmem>>, %arg13: memref<1x16xf32, #tpu.memory_space<vmem>>, %arg14: memref<1x16xf32, #tpu.memory_space<vmem>>, %arg15: memref<32x32xf32, #tpu.memory_space<vmem>>, %arg16: memref<1x32xf32, #tpu.memory_space<vmem>>, %arg17: memref<32x32xf32, #tpu.memory_space<vmem>>, %arg18: memref<1x32xf32, #tpu.memory_space<vmem>>, %arg19: memref<160x160xf32, #tpu.memory_space<vmem>>, %arg20: memref<1x160xf32, #tpu.memory_space<vmem>>, %arg21: memref<160x16xf32, #tpu.memory_space<vmem>>, %arg22: memref<1x16xf32, #tpu.memory_space<vmem>>, %arg23: memref<1x16xf32, #tpu.memory_space<vmem>>, %arg24: memref<1x16xf32, #tpu.memory_space<vmem>>, %arg25: memref<32x32xf32, #tpu.memory_space<vmem>>, %arg26: memref<1x32xf32, #tpu.memory_space<vmem>>, %arg27: memref<32x32xf32, #tpu.memory_space<vmem>>, %arg28: memref<1x32xf32, #tpu.memory_space<vmem>>, %arg29: memref<64x64xf32, #tpu.memory_space<vmem>>, %arg30: memref<1x64xf32, #tpu.memory_space<vmem>>, %arg31: memref<64x16xf32, #tpu.memory_space<vmem>>, %arg32: memref<1x16xf32, #tpu.memory_space<vmem>>, %arg33: memref<1x16xf32, #tpu.memory_space<vmem>>, %arg34: memref<1x16xf32, #tpu.memory_space<vmem>>, %arg35: memref<48x48xf32, #tpu.memory_space<vmem>>, %arg36: memref<1x48xf32, #tpu.memory_space<vmem>>, %arg37: memref<48x16xf32, #tpu.memory_space<vmem>>, %arg38: memref<1x16xf32, #tpu.memory_space<vmem>>, %arg39: memref<1x16xf32, #tpu.memory_space<vmem>>, %arg40: memref<8x16xf32, #tpu.memory_space<vmem>>, %arg41: memref<6x16xf32, #tpu.memory_space<vmem>>, %arg42: memref<24x16xf32, #tpu.memory_space<vmem>>, %arg43: memref<1x16xf32, #tpu.memory_space<vmem>>) attributes {dimension_semantics = [], scalar_prefetch = 0 : i64, scratch_operands = 0 : i64, tpu.core_type = #tpu.core_type<tc>} {
    %c0 = arith.constant 0 : index
    %c0_0 = arith.constant 0 : index
    %0 = vector.load %arg0[%c0, %c0_0] : memref<8x16xf32, #tpu.memory_space<vmem>>, vector<8x16xf32>
    %c0_1 = arith.constant 0 : index
    %c0_2 = arith.constant 0 : index
    %1 = vector.load %arg1[%c0_1, %c0_2] : memref<6x16xf32, #tpu.memory_space<vmem>>, vector<6x16xf32>
    %c0_3 = arith.constant 0 : index
    %c0_4 = arith.constant 0 : index
    %2 = vector.load %arg2[%c0_3, %c0_4] : memref<24x16xf32, #tpu.memory_space<vmem>>, vector<24x16xf32>
    %c0_5 = arith.constant 0 : index
    %c0_6 = arith.constant 0 : index
    %3 = vector.load %arg3[%c0_5, %c0_6] : memref<1x16xf32, #tpu.memory_space<vmem>>, vector<1x16xf32>
    %c0_7 = arith.constant 0 : index
    %c0_8 = arith.constant 0 : index
    %4 = vector.load %arg4[%c0_7, %c0_8] : memref<24x8xf32, #tpu.memory_space<vmem>>, vector<24x8xf32>
    %c0_9 = arith.constant 0 : index
    %c0_10 = arith.constant 0 : index
    %5 = vector.load %arg5[%c0_9, %c0_10] : memref<8x24xf32, #tpu.memory_space<vmem>>, vector<8x24xf32>
    %c0_11 = arith.constant 0 : index
    %c0_12 = arith.constant 0 : index
    %6 = vector.load %arg6[%c0_11, %c0_12] : memref<24x6xf32, #tpu.memory_space<vmem>>, vector<24x6xf32>
    %c0_13 = arith.constant 0 : index
    %c0_14 = arith.constant 0 : index
    %7 = vector.load %arg7[%c0_13, %c0_14] : memref<6x24xf32, #tpu.memory_space<vmem>>, vector<6x24xf32>
    %c0_15 = arith.constant 0 : index
    %c0_16 = arith.constant 0 : index
    %8 = vector.load %arg8[%c0_15, %c0_16] : memref<8x1xf32, #tpu.memory_space<vmem>>, vector<8x1xf32>
    %cst = arith.constant 1.000000e+00 : f32
    %9 = vector.broadcast %cst : f32 to vector<8x1xf32>
    %10 = arith.maximumf %8, %9 : vector<8x1xf32>
    %cst_17 = arith.constant dense<0.000000e+00> : vector<24x16xf32>
    %11 = tpu.matmul %4, %0, %cst_17 {dimension_numbers = #tpu.dot_dimension_numbers<[1], [0], [0], [1], [0, 0, 1, 1], [], []>} : vector<24x8xf32>, vector<8x16xf32>, vector<24x16xf32> -> vector<24x16xf32>
    %cst_18 = arith.constant dense<0.000000e+00> : vector<24x16xf32>
    %12 = tpu.matmul %6, %1, %cst_18 {dimension_numbers = #tpu.dot_dimension_numbers<[1], [0], [0], [1], [0, 0, 1, 1], [], []>} : vector<24x6xf32>, vector<6x16xf32>, vector<24x16xf32> -> vector<24x16xf32>
    %c0_19 = arith.constant 0 : index
    %c0_20 = arith.constant 0 : index
    %13 = vector.load %arg9[%c0_19, %c0_20] : memref<64x64xf32, #tpu.memory_space<vmem>>, vector<64x64xf32>
    %14 = vector.extract_strided_slice %13 {offsets = [0, 0], sizes = [16, 64], strides = [1, 1]} : vector<64x64xf32> to vector<16x64xf32>
    %cst_21 = arith.constant dense<0.000000e+00> : vector<24x64xf32>
    %15 = tpu.matmul %11, %14, %cst_21 {dimension_numbers = #tpu.dot_dimension_numbers<[1], [0], [0], [1], [0, 0, 1, 1], [], []>} : vector<24x16xf32>, vector<16x64xf32>, vector<24x64xf32> -> vector<24x64xf32>
    %16 = vector.extract_strided_slice %13 {offsets = [16, 0], sizes = [16, 64], strides = [1, 1]} : vector<64x64xf32> to vector<16x64xf32>
    %cst_22 = arith.constant dense<0.000000e+00> : vector<24x64xf32>
    %17 = tpu.matmul %12, %16, %cst_22 {dimension_numbers = #tpu.dot_dimension_numbers<[1], [0], [0], [1], [0, 0, 1, 1], [], []>} : vector<24x16xf32>, vector<16x64xf32>, vector<24x64xf32> -> vector<24x64xf32>
    %18 = arith.addf %15, %17 : vector<24x64xf32>
    %19 = vector.extract_strided_slice %13 {offsets = [32, 0], sizes = [16, 64], strides = [1, 1]} : vector<64x64xf32> to vector<16x64xf32>
    %cst_23 = arith.constant dense<0.000000e+00> : vector<24x64xf32>
    %20 = tpu.matmul %2, %19, %cst_23 {dimension_numbers = #tpu.dot_dimension_numbers<[1], [0], [0], [1], [0, 0, 1, 1], [], []>} : vector<24x16xf32>, vector<16x64xf32>, vector<24x64xf32> -> vector<24x64xf32>
    %21 = arith.addf %18, %20 : vector<24x64xf32>
    %22 = vector.extract_strided_slice %13 {offsets = [48, 0], sizes = [16, 64], strides = [1, 1]} : vector<64x64xf32> to vector<16x64xf32>
    %cst_24 = arith.constant dense<0.000000e+00> : vector<1x64xf32>
    %23 = tpu.matmul %3, %22, %cst_24 {dimension_numbers = #tpu.dot_dimension_numbers<[1], [0], [0], [1], [0, 0, 1, 1], [], []>} : vector<1x16xf32>, vector<16x64xf32>, vector<1x64xf32> -> vector<1x64xf32>
    %c0_25 = arith.constant 0 : index
    %c0_26 = arith.constant 0 : index
    %24 = vector.load %arg10[%c0_25, %c0_26] : memref<1x64xf32, #tpu.memory_space<vmem>>, vector<1x64xf32>
    %25 = arith.addf %23, %24 : vector<1x64xf32>
    %26 = vector.broadcast %25 : vector<1x64xf32> to vector<24x64xf32>
    %27 = arith.addf %21, %26 : vector<24x64xf32>
    %cst_27 = arith.constant 0.000000e+00 : f32
    %28 = vector.broadcast %cst_27 : f32 to vector<24x64xf32>
    %29 = arith.cmpf oge, %27, %28 : vector<24x64xf32>
    %cst_28 = arith.constant 1.000000e-01 : f32
    %30 = vector.broadcast %cst_28 : f32 to vector<24x64xf32>
    %31 = arith.mulf %30, %27 : vector<24x64xf32>
    %32 = arith.select %29, %27, %31 : vector<24x64xi1>, vector<24x64xf32>
    %c0_29 = arith.constant 0 : index
    %c0_30 = arith.constant 0 : index
    %33 = vector.load %arg11[%c0_29, %c0_30] : memref<64x16xf32, #tpu.memory_space<vmem>>, vector<64x16xf32>
    %cst_31 = arith.constant dense<0.000000e+00> : vector<24x16xf32>
    %34 = tpu.matmul %32, %33, %cst_31 {dimension_numbers = #tpu.dot_dimension_numbers<[1], [0], [0], [1], [0, 0, 1, 1], [], []>} : vector<24x64xf32>, vector<64x16xf32>, vector<24x16xf32> -> vector<24x16xf32>
    %c0_32 = arith.constant 0 : index
    %c0_33 = arith.constant 0 : index
    %35 = vector.load %arg12[%c0_32, %c0_33] : memref<1x16xf32, #tpu.memory_space<vmem>>, vector<1x16xf32>
    %36 = vector.broadcast %35 : vector<1x16xf32> to vector<24x16xf32>
    %37 = arith.addf %34, %36 : vector<24x16xf32>
    %c0_34 = arith.constant 0 : index
    %c0_35 = arith.constant 0 : index
    %38 = vector.load %arg13[%c0_34, %c0_35] : memref<1x16xf32, #tpu.memory_space<vmem>>, vector<1x16xf32>
    %c0_36 = arith.constant 0 : index
    %c0_37 = arith.constant 0 : index
    %39 = vector.load %arg14[%c0_36, %c0_37] : memref<1x16xf32, #tpu.memory_space<vmem>>, vector<1x16xf32>
    %cst_38 = arith.constant dense<0.000000e+00> : vector<16xf32>
    %40 = vector.multi_reduction <add>, %37, %cst_38 [0] : vector<24x16xf32> to vector<16xf32>
    %41 = vector.shape_cast %40 : vector<16xf32> to vector<1x16xf32>
    %cst_39 = arith.constant 2.400000e+01 : f32
    %42 = vector.broadcast %cst_39 : f32 to vector<1x16xf32>
    %43 = arith.divf %41, %42 : vector<1x16xf32>
    %44 = vector.broadcast %43 : vector<1x16xf32> to vector<24x16xf32>
    %45 = arith.subf %37, %44 : vector<24x16xf32>
    %46 = arith.mulf %45, %45 : vector<24x16xf32>
    %cst_40 = arith.constant dense<0.000000e+00> : vector<16xf32>
    %47 = vector.multi_reduction <add>, %46, %cst_40 [0] : vector<24x16xf32> to vector<16xf32>
    %48 = vector.shape_cast %47 : vector<16xf32> to vector<1x16xf32>
    %cst_41 = arith.constant 2.400000e+01 : f32
    %49 = vector.broadcast %cst_41 : f32 to vector<1x16xf32>
    %50 = arith.divf %48, %49 : vector<1x16xf32>
    %51 = vector.broadcast %43 : vector<1x16xf32> to vector<24x16xf32>
    %52 = arith.subf %37, %51 : vector<24x16xf32>
    %cst_42 = arith.constant 9.99999974E-6 : f32
    %53 = vector.broadcast %cst_42 : f32 to vector<1x16xf32>
    %54 = arith.addf %50, %53 : vector<1x16xf32>
    %55 = math.rsqrt %54 : vector<1x16xf32>
    %56 = vector.broadcast %55 : vector<1x16xf32> to vector<24x16xf32>
    %57 = arith.mulf %52, %56 : vector<24x16xf32>
    %58 = vector.broadcast %38 : vector<1x16xf32> to vector<24x16xf32>
    %59 = arith.mulf %57, %58 : vector<24x16xf32>
    %60 = vector.broadcast %39 : vector<1x16xf32> to vector<24x16xf32>
    %61 = arith.addf %59, %60 : vector<24x16xf32>
    %c0_43 = arith.constant 0 : index
    %c0_44 = arith.constant 0 : index
    %62 = vector.load %arg15[%c0_43, %c0_44] : memref<32x32xf32, #tpu.memory_space<vmem>>, vector<32x32xf32>
    %63 = vector.extract_strided_slice %62 {offsets = [0, 0], sizes = [16, 32], strides = [1, 1]} : vector<32x32xf32> to vector<16x32xf32>
    %cst_45 = arith.constant dense<0.000000e+00> : vector<24x32xf32>
    %64 = tpu.matmul %12, %63, %cst_45 {dimension_numbers = #tpu.dot_dimension_numbers<[1], [0], [0], [1], [0, 0, 1, 1], [], []>} : vector<24x16xf32>, vector<16x32xf32>, vector<24x32xf32> -> vector<24x32xf32>
    %65 = vector.extract_strided_slice %62 {offsets = [16, 0], sizes = [16, 32], strides = [1, 1]} : vector<32x32xf32> to vector<16x32xf32>
    %cst_46 = arith.constant dense<0.000000e+00> : vector<24x32xf32>
    %66 = tpu.matmul %61, %65, %cst_46 {dimension_numbers = #tpu.dot_dimension_numbers<[1], [0], [0], [1], [0, 0, 1, 1], [], []>} : vector<24x16xf32>, vector<16x32xf32>, vector<24x32xf32> -> vector<24x32xf32>
    %67 = arith.addf %64, %66 : vector<24x32xf32>
    %c0_47 = arith.constant 0 : index
    %c0_48 = arith.constant 0 : index
    %68 = vector.load %arg16[%c0_47, %c0_48] : memref<1x32xf32, #tpu.memory_space<vmem>>, vector<1x32xf32>
    %69 = vector.broadcast %68 : vector<1x32xf32> to vector<24x32xf32>
    %70 = arith.addf %67, %69 : vector<24x32xf32>
    %cst_49 = arith.constant 0.000000e+00 : f32
    %71 = vector.broadcast %cst_49 : f32 to vector<24x32xf32>
    %72 = arith.cmpf oge, %70, %71 : vector<24x32xf32>
    %cst_50 = arith.constant 1.000000e-01 : f32
    %73 = vector.broadcast %cst_50 : f32 to vector<24x32xf32>
    %74 = arith.mulf %73, %70 : vector<24x32xf32>
    %75 = arith.select %72, %70, %74 : vector<24x32xi1>, vector<24x32xf32>
    %c0_51 = arith.constant 0 : index
    %c0_52 = arith.constant 0 : index
    %76 = vector.load %arg17[%c0_51, %c0_52] : memref<32x32xf32, #tpu.memory_space<vmem>>, vector<32x32xf32>
    %cst_53 = arith.constant dense<0.000000e+00> : vector<24x32xf32>
    %77 = tpu.matmul %75, %76, %cst_53 {dimension_numbers = #tpu.dot_dimension_numbers<[1], [0], [0], [1], [0, 0, 1, 1], [], []>} : vector<24x32xf32>, vector<32x32xf32>, vector<24x32xf32> -> vector<24x32xf32>
    %c0_54 = arith.constant 0 : index
    %c0_55 = arith.constant 0 : index
    %78 = vector.load %arg18[%c0_54, %c0_55] : memref<1x32xf32, #tpu.memory_space<vmem>>, vector<1x32xf32>
    %79 = vector.broadcast %78 : vector<1x32xf32> to vector<24x32xf32>
    %80 = arith.addf %77, %79 : vector<24x32xf32>
    %cst_56 = arith.constant dense<0.000000e+00> : vector<8x32xf32>
    %81 = tpu.matmul %5, %80, %cst_56 {dimension_numbers = #tpu.dot_dimension_numbers<[1], [0], [0], [1], [0, 0, 1, 1], [], []>} : vector<8x24xf32>, vector<24x32xf32>, vector<8x32xf32> -> vector<8x32xf32>
    %82 = arith.mulf %80, %80 : vector<24x32xf32>
    %cst_57 = arith.constant dense<0.000000e+00> : vector<8x32xf32>
    %83 = tpu.matmul %5, %82, %cst_57 {dimension_numbers = #tpu.dot_dimension_numbers<[1], [0], [0], [1], [0, 0, 1, 1], [], []>} : vector<8x24xf32>, vector<24x32xf32>, vector<8x32xf32> -> vector<8x32xf32>
    %84 = vector.broadcast %10 : vector<8x1xf32> to vector<8x32xf32>
    %85 = arith.divf %81, %84 : vector<8x32xf32>
    %86 = vector.broadcast %10 : vector<8x1xf32> to vector<8x32xf32>
    %87 = arith.divf %83, %86 : vector<8x32xf32>
    %88 = arith.mulf %85, %85 : vector<8x32xf32>
    %89 = arith.subf %87, %88 : vector<8x32xf32>
    %cst_58 = arith.constant 0.000000e+00 : f32
    %90 = vector.broadcast %cst_58 : f32 to vector<8x32xf32>
    %91 = arith.cmpf oge, %89, %90 : vector<8x32xf32>
    %cst_59 = arith.constant 0.00999999977 : f32
    %92 = vector.broadcast %cst_59 : f32 to vector<8x32xf32>
    %93 = arith.mulf %92, %89 : vector<8x32xf32>
    %94 = arith.select %91, %89, %93 : vector<8x32xi1>, vector<8x32xf32>
    %cst_60 = arith.constant 9.99999997E-7 : f32
    %95 = vector.broadcast %cst_60 : f32 to vector<8x32xf32>
    %96 = arith.addf %94, %95 : vector<8x32xf32>
    %97 = math.sqrt %96 : vector<8x32xf32>
    %cst_61 = arith.constant dense<0.000000e+00> : vector<24x32xf32>
    %98 = tpu.matmul %4, %85, %cst_61 {dimension_numbers = #tpu.dot_dimension_numbers<[1], [0], [0], [1], [0, 0, 1, 1], [], []>} : vector<24x8xf32>, vector<8x32xf32>, vector<24x32xf32> -> vector<24x32xf32>
    %99 = arith.subf %80, %98 : vector<24x32xf32>
    %100 = arith.mulf %99, %99 : vector<24x32xf32>
    %101 = arith.mulf %100, %99 : vector<24x32xf32>
    %cst_62 = arith.constant dense<0.000000e+00> : vector<8x32xf32>
    %102 = tpu.matmul %5, %101, %cst_62 {dimension_numbers = #tpu.dot_dimension_numbers<[1], [0], [0], [1], [0, 0, 1, 1], [], []>} : vector<8x24xf32>, vector<24x32xf32>, vector<8x32xf32> -> vector<8x32xf32>
    %103 = arith.mulf %100, %100 : vector<24x32xf32>
    %cst_63 = arith.constant dense<0.000000e+00> : vector<8x32xf32>
    %104 = tpu.matmul %5, %103, %cst_63 {dimension_numbers = #tpu.dot_dimension_numbers<[1], [0], [0], [1], [0, 0, 1, 1], [], []>} : vector<8x24xf32>, vector<24x32xf32>, vector<8x32xf32> -> vector<8x32xf32>
    %105 = arith.mulf %97, %97 : vector<8x32xf32>
    %106 = arith.mulf %105, %97 : vector<8x32xf32>
    %107 = vector.broadcast %10 : vector<8x1xf32> to vector<8x32xf32>
    %108 = arith.divf %102, %107 : vector<8x32xf32>
    %109 = arith.divf %108, %106 : vector<8x32xf32>
    %110 = vector.broadcast %10 : vector<8x1xf32> to vector<8x32xf32>
    %111 = arith.divf %104, %110 : vector<8x32xf32>
    %112 = arith.mulf %106, %97 : vector<8x32xf32>
    %113 = arith.divf %111, %112 : vector<8x32xf32>
    %114 = arith.cmpf one, %85, %85 : vector<8x32xf32>
    %cst_64 = arith.constant 0.000000e+00 : f32
    %115 = vector.broadcast %cst_64 : f32 to vector<8x32xf32>
    %116 = arith.select %114, %115, %85 : vector<8x32xi1>, vector<8x32xf32>
    %cst_65 = arith.constant -3.40282347E+38 : f32
    %cst_66 = arith.constant 3.40282347E+38 : f32
    %117 = vector.broadcast %cst_65 : f32 to vector<8x32xf32>
    %118 = arith.maximumf %117, %116 : vector<8x32xf32>
    %119 = vector.broadcast %cst_66 : f32 to vector<8x32xf32>
    %120 = arith.minimumf %119, %118 : vector<8x32xf32>
    %121 = arith.cmpf one, %94, %94 : vector<8x32xf32>
    %cst_67 = arith.constant 0.000000e+00 : f32
    %122 = vector.broadcast %cst_67 : f32 to vector<8x32xf32>
    %123 = arith.select %121, %122, %94 : vector<8x32xi1>, vector<8x32xf32>
    %cst_68 = arith.constant -3.40282347E+38 : f32
    %cst_69 = arith.constant 3.40282347E+38 : f32
    %124 = vector.broadcast %cst_68 : f32 to vector<8x32xf32>
    %125 = arith.maximumf %124, %123 : vector<8x32xf32>
    %126 = vector.broadcast %cst_69 : f32 to vector<8x32xf32>
    %127 = arith.minimumf %126, %125 : vector<8x32xf32>
    %cst_70 = arith.constant 9.99999997E-7 : f32
    %128 = vector.broadcast %cst_70 : f32 to vector<8x32xf32>
    %129 = arith.addf %127, %128 : vector<8x32xf32>
    %130 = math.sqrt %129 : vector<8x32xf32>
    %131 = arith.cmpf one, %109, %109 : vector<8x32xf32>
    %cst_71 = arith.constant 0.000000e+00 : f32
    %132 = vector.broadcast %cst_71 : f32 to vector<8x32xf32>
    %133 = arith.select %131, %132, %109 : vector<8x32xi1>, vector<8x32xf32>
    %cst_72 = arith.constant -3.40282347E+38 : f32
    %cst_73 = arith.constant 3.40282347E+38 : f32
    %134 = vector.broadcast %cst_72 : f32 to vector<8x32xf32>
    %135 = arith.maximumf %134, %133 : vector<8x32xf32>
    %136 = vector.broadcast %cst_73 : f32 to vector<8x32xf32>
    %137 = arith.minimumf %136, %135 : vector<8x32xf32>
    %138 = arith.cmpf one, %113, %113 : vector<8x32xf32>
    %cst_74 = arith.constant 0.000000e+00 : f32
    %139 = vector.broadcast %cst_74 : f32 to vector<8x32xf32>
    %140 = arith.select %138, %139, %113 : vector<8x32xi1>, vector<8x32xf32>
    %cst_75 = arith.constant -3.40282347E+38 : f32
    %cst_76 = arith.constant 3.40282347E+38 : f32
    %141 = vector.broadcast %cst_75 : f32 to vector<8x32xf32>
    %142 = arith.maximumf %141, %140 : vector<8x32xf32>
    %143 = vector.broadcast %cst_76 : f32 to vector<8x32xf32>
    %144 = arith.minimumf %143, %142 : vector<8x32xf32>
    %c0_77 = arith.constant 0 : index
    %c0_78 = arith.constant 0 : index
    %145 = vector.load %arg19[%c0_77, %c0_78] : memref<160x160xf32, #tpu.memory_space<vmem>>, vector<160x160xf32>
    %146 = vector.extract_strided_slice %145 {offsets = [0, 0], sizes = [16, 160], strides = [1, 1]} : vector<160x160xf32> to vector<16x160xf32>
    %cst_79 = arith.constant dense<0.000000e+00> : vector<8x160xf32>
    %147 = tpu.matmul %0, %146, %cst_79 {dimension_numbers = #tpu.dot_dimension_numbers<[1], [0], [0], [1], [0, 0, 1, 1], [], []>} : vector<8x16xf32>, vector<16x160xf32>, vector<8x160xf32> -> vector<8x160xf32>
    %148 = vector.extract_strided_slice %145 {offsets = [16, 0], sizes = [32, 160], strides = [1, 1]} : vector<160x160xf32> to vector<32x160xf32>
    %cst_80 = arith.constant dense<0.000000e+00> : vector<8x160xf32>
    %149 = tpu.matmul %120, %148, %cst_80 {dimension_numbers = #tpu.dot_dimension_numbers<[1], [0], [0], [1], [0, 0, 1, 1], [], []>} : vector<8x32xf32>, vector<32x160xf32>, vector<8x160xf32> -> vector<8x160xf32>
    %150 = arith.addf %147, %149 : vector<8x160xf32>
    %151 = vector.extract_strided_slice %145 {offsets = [48, 0], sizes = [32, 160], strides = [1, 1]} : vector<160x160xf32> to vector<32x160xf32>
    %cst_81 = arith.constant dense<0.000000e+00> : vector<8x160xf32>
    %152 = tpu.matmul %130, %151, %cst_81 {dimension_numbers = #tpu.dot_dimension_numbers<[1], [0], [0], [1], [0, 0, 1, 1], [], []>} : vector<8x32xf32>, vector<32x160xf32>, vector<8x160xf32> -> vector<8x160xf32>
    %153 = arith.addf %150, %152 : vector<8x160xf32>
    %154 = vector.extract_strided_slice %145 {offsets = [80, 0], sizes = [32, 160], strides = [1, 1]} : vector<160x160xf32> to vector<32x160xf32>
    %cst_82 = arith.constant dense<0.000000e+00> : vector<8x160xf32>
    %155 = tpu.matmul %137, %154, %cst_82 {dimension_numbers = #tpu.dot_dimension_numbers<[1], [0], [0], [1], [0, 0, 1, 1], [], []>} : vector<8x32xf32>, vector<32x160xf32>, vector<8x160xf32> -> vector<8x160xf32>
    %156 = arith.addf %153, %155 : vector<8x160xf32>
    %157 = vector.extract_strided_slice %145 {offsets = [112, 0], sizes = [32, 160], strides = [1, 1]} : vector<160x160xf32> to vector<32x160xf32>
    %cst_83 = arith.constant dense<0.000000e+00> : vector<8x160xf32>
    %158 = tpu.matmul %144, %157, %cst_83 {dimension_numbers = #tpu.dot_dimension_numbers<[1], [0], [0], [1], [0, 0, 1, 1], [], []>} : vector<8x32xf32>, vector<32x160xf32>, vector<8x160xf32> -> vector<8x160xf32>
    %159 = arith.addf %156, %158 : vector<8x160xf32>
    %160 = vector.extract_strided_slice %145 {offsets = [144, 0], sizes = [16, 160], strides = [1, 1]} : vector<160x160xf32> to vector<16x160xf32>
    %cst_84 = arith.constant dense<0.000000e+00> : vector<1x160xf32>
    %161 = tpu.matmul %3, %160, %cst_84 {dimension_numbers = #tpu.dot_dimension_numbers<[1], [0], [0], [1], [0, 0, 1, 1], [], []>} : vector<1x16xf32>, vector<16x160xf32>, vector<1x160xf32> -> vector<1x160xf32>
    %c0_85 = arith.constant 0 : index
    %c0_86 = arith.constant 0 : index
    %162 = vector.load %arg20[%c0_85, %c0_86] : memref<1x160xf32, #tpu.memory_space<vmem>>, vector<1x160xf32>
    %163 = arith.addf %161, %162 : vector<1x160xf32>
    %164 = vector.broadcast %163 : vector<1x160xf32> to vector<8x160xf32>
    %165 = arith.addf %159, %164 : vector<8x160xf32>
    %cst_87 = arith.constant 0.000000e+00 : f32
    %166 = vector.broadcast %cst_87 : f32 to vector<8x160xf32>
    %167 = arith.cmpf oge, %165, %166 : vector<8x160xf32>
    %cst_88 = arith.constant 1.000000e-01 : f32
    %168 = vector.broadcast %cst_88 : f32 to vector<8x160xf32>
    %169 = arith.mulf %168, %165 : vector<8x160xf32>
    %170 = arith.select %167, %165, %169 : vector<8x160xi1>, vector<8x160xf32>
    %c0_89 = arith.constant 0 : index
    %c0_90 = arith.constant 0 : index
    %171 = vector.load %arg21[%c0_89, %c0_90] : memref<160x16xf32, #tpu.memory_space<vmem>>, vector<160x16xf32>
    %cst_91 = arith.constant dense<0.000000e+00> : vector<8x16xf32>
    %172 = tpu.matmul %170, %171, %cst_91 {dimension_numbers = #tpu.dot_dimension_numbers<[1], [0], [0], [1], [0, 0, 1, 1], [], []>} : vector<8x160xf32>, vector<160x16xf32>, vector<8x16xf32> -> vector<8x16xf32>
    %c0_92 = arith.constant 0 : index
    %c0_93 = arith.constant 0 : index
    %173 = vector.load %arg22[%c0_92, %c0_93] : memref<1x16xf32, #tpu.memory_space<vmem>>, vector<1x16xf32>
    %174 = vector.broadcast %173 : vector<1x16xf32> to vector<8x16xf32>
    %175 = arith.addf %172, %174 : vector<8x16xf32>
    %c0_94 = arith.constant 0 : index
    %c0_95 = arith.constant 0 : index
    %176 = vector.load %arg23[%c0_94, %c0_95] : memref<1x16xf32, #tpu.memory_space<vmem>>, vector<1x16xf32>
    %c0_96 = arith.constant 0 : index
    %c0_97 = arith.constant 0 : index
    %177 = vector.load %arg24[%c0_96, %c0_97] : memref<1x16xf32, #tpu.memory_space<vmem>>, vector<1x16xf32>
    %cst_98 = arith.constant dense<0.000000e+00> : vector<16xf32>
    %178 = vector.multi_reduction <add>, %175, %cst_98 [0] : vector<8x16xf32> to vector<16xf32>
    %179 = vector.shape_cast %178 : vector<16xf32> to vector<1x16xf32>
    %cst_99 = arith.constant 8.000000e+00 : f32
    %180 = vector.broadcast %cst_99 : f32 to vector<1x16xf32>
    %181 = arith.divf %179, %180 : vector<1x16xf32>
    %182 = vector.broadcast %181 : vector<1x16xf32> to vector<8x16xf32>
    %183 = arith.subf %175, %182 : vector<8x16xf32>
    %184 = arith.mulf %183, %183 : vector<8x16xf32>
    %cst_100 = arith.constant dense<0.000000e+00> : vector<16xf32>
    %185 = vector.multi_reduction <add>, %184, %cst_100 [0] : vector<8x16xf32> to vector<16xf32>
    %186 = vector.shape_cast %185 : vector<16xf32> to vector<1x16xf32>
    %cst_101 = arith.constant 8.000000e+00 : f32
    %187 = vector.broadcast %cst_101 : f32 to vector<1x16xf32>
    %188 = arith.divf %186, %187 : vector<1x16xf32>
    %189 = vector.broadcast %181 : vector<1x16xf32> to vector<8x16xf32>
    %190 = arith.subf %175, %189 : vector<8x16xf32>
    %cst_102 = arith.constant 9.99999974E-6 : f32
    %191 = vector.broadcast %cst_102 : f32 to vector<1x16xf32>
    %192 = arith.addf %188, %191 : vector<1x16xf32>
    %193 = math.rsqrt %192 : vector<1x16xf32>
    %194 = vector.broadcast %193 : vector<1x16xf32> to vector<8x16xf32>
    %195 = arith.mulf %190, %194 : vector<8x16xf32>
    %196 = vector.broadcast %176 : vector<1x16xf32> to vector<8x16xf32>
    %197 = arith.mulf %195, %196 : vector<8x16xf32>
    %198 = vector.broadcast %177 : vector<1x16xf32> to vector<8x16xf32>
    %199 = arith.addf %197, %198 : vector<8x16xf32>
    %cst_103 = arith.constant dense<0.000000e+00> : vector<24x16xf32>
    %200 = tpu.matmul %4, %199, %cst_103 {dimension_numbers = #tpu.dot_dimension_numbers<[1], [0], [0], [1], [0, 0, 1, 1], [], []>} : vector<24x8xf32>, vector<8x16xf32>, vector<24x16xf32> -> vector<24x16xf32>
    %c0_104 = arith.constant 0 : index
    %c0_105 = arith.constant 0 : index
    %201 = vector.load %arg25[%c0_104, %c0_105] : memref<32x32xf32, #tpu.memory_space<vmem>>, vector<32x32xf32>
    %202 = vector.extract_strided_slice %201 {offsets = [0, 0], sizes = [16, 32], strides = [1, 1]} : vector<32x32xf32> to vector<16x32xf32>
    %cst_106 = arith.constant dense<0.000000e+00> : vector<24x32xf32>
    %203 = tpu.matmul %200, %202, %cst_106 {dimension_numbers = #tpu.dot_dimension_numbers<[1], [0], [0], [1], [0, 0, 1, 1], [], []>} : vector<24x16xf32>, vector<16x32xf32>, vector<24x32xf32> -> vector<24x32xf32>
    %204 = vector.extract_strided_slice %201 {offsets = [16, 0], sizes = [16, 32], strides = [1, 1]} : vector<32x32xf32> to vector<16x32xf32>
    %cst_107 = arith.constant dense<0.000000e+00> : vector<24x32xf32>
    %205 = tpu.matmul %61, %204, %cst_107 {dimension_numbers = #tpu.dot_dimension_numbers<[1], [0], [0], [1], [0, 0, 1, 1], [], []>} : vector<24x16xf32>, vector<16x32xf32>, vector<24x32xf32> -> vector<24x32xf32>
    %206 = arith.addf %203, %205 : vector<24x32xf32>
    %c0_108 = arith.constant 0 : index
    %c0_109 = arith.constant 0 : index
    %207 = vector.load %arg26[%c0_108, %c0_109] : memref<1x32xf32, #tpu.memory_space<vmem>>, vector<1x32xf32>
    %208 = vector.broadcast %207 : vector<1x32xf32> to vector<24x32xf32>
    %209 = arith.addf %206, %208 : vector<24x32xf32>
    %cst_110 = arith.constant 0.000000e+00 : f32
    %210 = vector.broadcast %cst_110 : f32 to vector<24x32xf32>
    %211 = arith.cmpf oge, %209, %210 : vector<24x32xf32>
    %cst_111 = arith.constant 1.000000e-01 : f32
    %212 = vector.broadcast %cst_111 : f32 to vector<24x32xf32>
    %213 = arith.mulf %212, %209 : vector<24x32xf32>
    %214 = arith.select %211, %209, %213 : vector<24x32xi1>, vector<24x32xf32>
    %c0_112 = arith.constant 0 : index
    %c0_113 = arith.constant 0 : index
    %215 = vector.load %arg27[%c0_112, %c0_113] : memref<32x32xf32, #tpu.memory_space<vmem>>, vector<32x32xf32>
    %cst_114 = arith.constant dense<0.000000e+00> : vector<24x32xf32>
    %216 = tpu.matmul %214, %215, %cst_114 {dimension_numbers = #tpu.dot_dimension_numbers<[1], [0], [0], [1], [0, 0, 1, 1], [], []>} : vector<24x32xf32>, vector<32x32xf32>, vector<24x32xf32> -> vector<24x32xf32>
    %c0_115 = arith.constant 0 : index
    %c0_116 = arith.constant 0 : index
    %217 = vector.load %arg28[%c0_115, %c0_116] : memref<1x32xf32, #tpu.memory_space<vmem>>, vector<1x32xf32>
    %218 = vector.broadcast %217 : vector<1x32xf32> to vector<24x32xf32>
    %219 = arith.addf %216, %218 : vector<24x32xf32>
    %cst_117 = arith.constant dense<0.000000e+00> : vector<6x32xf32>
    %220 = tpu.matmul %7, %219, %cst_117 {dimension_numbers = #tpu.dot_dimension_numbers<[1], [0], [0], [1], [0, 0, 1, 1], [], []>} : vector<6x24xf32>, vector<24x32xf32>, vector<6x32xf32> -> vector<6x32xf32>
    %c0_118 = arith.constant 0 : index
    %c0_119 = arith.constant 0 : index
    %221 = vector.load %arg29[%c0_118, %c0_119] : memref<64x64xf32, #tpu.memory_space<vmem>>, vector<64x64xf32>
    %222 = vector.extract_strided_slice %221 {offsets = [0, 0], sizes = [16, 64], strides = [1, 1]} : vector<64x64xf32> to vector<16x64xf32>
    %cst_120 = arith.constant dense<0.000000e+00> : vector<6x64xf32>
    %223 = tpu.matmul %1, %222, %cst_120 {dimension_numbers = #tpu.dot_dimension_numbers<[1], [0], [0], [1], [0, 0, 1, 1], [], []>} : vector<6x16xf32>, vector<16x64xf32>, vector<6x64xf32> -> vector<6x64xf32>
    %224 = vector.extract_strided_slice %221 {offsets = [16, 0], sizes = [32, 64], strides = [1, 1]} : vector<64x64xf32> to vector<32x64xf32>
    %cst_121 = arith.constant dense<0.000000e+00> : vector<6x64xf32>
    %225 = tpu.matmul %220, %224, %cst_121 {dimension_numbers = #tpu.dot_dimension_numbers<[1], [0], [0], [1], [0, 0, 1, 1], [], []>} : vector<6x32xf32>, vector<32x64xf32>, vector<6x64xf32> -> vector<6x64xf32>
    %226 = arith.addf %223, %225 : vector<6x64xf32>
    %227 = vector.extract_strided_slice %221 {offsets = [48, 0], sizes = [16, 64], strides = [1, 1]} : vector<64x64xf32> to vector<16x64xf32>
    %cst_122 = arith.constant dense<0.000000e+00> : vector<1x64xf32>
    %228 = tpu.matmul %3, %227, %cst_122 {dimension_numbers = #tpu.dot_dimension_numbers<[1], [0], [0], [1], [0, 0, 1, 1], [], []>} : vector<1x16xf32>, vector<16x64xf32>, vector<1x64xf32> -> vector<1x64xf32>
    %c0_123 = arith.constant 0 : index
    %c0_124 = arith.constant 0 : index
    %229 = vector.load %arg30[%c0_123, %c0_124] : memref<1x64xf32, #tpu.memory_space<vmem>>, vector<1x64xf32>
    %230 = arith.addf %228, %229 : vector<1x64xf32>
    %231 = vector.broadcast %230 : vector<1x64xf32> to vector<6x64xf32>
    %232 = arith.addf %226, %231 : vector<6x64xf32>
    %cst_125 = arith.constant 0.000000e+00 : f32
    %233 = vector.broadcast %cst_125 : f32 to vector<6x64xf32>
    %234 = arith.cmpf oge, %232, %233 : vector<6x64xf32>
    %cst_126 = arith.constant 1.000000e-01 : f32
    %235 = vector.broadcast %cst_126 : f32 to vector<6x64xf32>
    %236 = arith.mulf %235, %232 : vector<6x64xf32>
    %237 = arith.select %234, %232, %236 : vector<6x64xi1>, vector<6x64xf32>
    %c0_127 = arith.constant 0 : index
    %c0_128 = arith.constant 0 : index
    %238 = vector.load %arg31[%c0_127, %c0_128] : memref<64x16xf32, #tpu.memory_space<vmem>>, vector<64x16xf32>
    %cst_129 = arith.constant dense<0.000000e+00> : vector<6x16xf32>
    %239 = tpu.matmul %237, %238, %cst_129 {dimension_numbers = #tpu.dot_dimension_numbers<[1], [0], [0], [1], [0, 0, 1, 1], [], []>} : vector<6x64xf32>, vector<64x16xf32>, vector<6x16xf32> -> vector<6x16xf32>
    %c0_130 = arith.constant 0 : index
    %c0_131 = arith.constant 0 : index
    %240 = vector.load %arg32[%c0_130, %c0_131] : memref<1x16xf32, #tpu.memory_space<vmem>>, vector<1x16xf32>
    %241 = vector.broadcast %240 : vector<1x16xf32> to vector<6x16xf32>
    %242 = arith.addf %239, %241 : vector<6x16xf32>
    %c0_132 = arith.constant 0 : index
    %c0_133 = arith.constant 0 : index
    %243 = vector.load %arg33[%c0_132, %c0_133] : memref<1x16xf32, #tpu.memory_space<vmem>>, vector<1x16xf32>
    %c0_134 = arith.constant 0 : index
    %c0_135 = arith.constant 0 : index
    %244 = vector.load %arg34[%c0_134, %c0_135] : memref<1x16xf32, #tpu.memory_space<vmem>>, vector<1x16xf32>
    %cst_136 = arith.constant dense<0.000000e+00> : vector<16xf32>
    %245 = vector.multi_reduction <add>, %242, %cst_136 [0] : vector<6x16xf32> to vector<16xf32>
    %246 = vector.shape_cast %245 : vector<16xf32> to vector<1x16xf32>
    %cst_137 = arith.constant 6.000000e+00 : f32
    %247 = vector.broadcast %cst_137 : f32 to vector<1x16xf32>
    %248 = arith.divf %246, %247 : vector<1x16xf32>
    %249 = vector.broadcast %248 : vector<1x16xf32> to vector<6x16xf32>
    %250 = arith.subf %242, %249 : vector<6x16xf32>
    %251 = arith.mulf %250, %250 : vector<6x16xf32>
    %cst_138 = arith.constant dense<0.000000e+00> : vector<16xf32>
    %252 = vector.multi_reduction <add>, %251, %cst_138 [0] : vector<6x16xf32> to vector<16xf32>
    %253 = vector.shape_cast %252 : vector<16xf32> to vector<1x16xf32>
    %cst_139 = arith.constant 6.000000e+00 : f32
    %254 = vector.broadcast %cst_139 : f32 to vector<1x16xf32>
    %255 = arith.divf %253, %254 : vector<1x16xf32>
    %256 = vector.broadcast %248 : vector<1x16xf32> to vector<6x16xf32>
    %257 = arith.subf %242, %256 : vector<6x16xf32>
    %cst_140 = arith.constant 9.99999974E-6 : f32
    %258 = vector.broadcast %cst_140 : f32 to vector<1x16xf32>
    %259 = arith.addf %255, %258 : vector<1x16xf32>
    %260 = math.rsqrt %259 : vector<1x16xf32>
    %261 = vector.broadcast %260 : vector<1x16xf32> to vector<6x16xf32>
    %262 = arith.mulf %257, %261 : vector<6x16xf32>
    %263 = vector.broadcast %243 : vector<1x16xf32> to vector<6x16xf32>
    %264 = arith.mulf %262, %263 : vector<6x16xf32>
    %265 = vector.broadcast %244 : vector<1x16xf32> to vector<6x16xf32>
    %266 = arith.addf %264, %265 : vector<6x16xf32>
    %cst_141 = arith.constant dense<0.000000e+00> : vector<16xf32>
    %267 = vector.multi_reduction <add>, %199, %cst_141 [0] : vector<8x16xf32> to vector<16xf32>
    %268 = vector.shape_cast %267 : vector<16xf32> to vector<1x16xf32>
    %cst_142 = arith.constant 8.000000e+00 : f32
    %269 = vector.broadcast %cst_142 : f32 to vector<1x16xf32>
    %270 = arith.divf %268, %269 : vector<1x16xf32>
    %cst_143 = arith.constant dense<0.000000e+00> : vector<16xf32>
    %271 = vector.multi_reduction <add>, %266, %cst_143 [0] : vector<6x16xf32> to vector<16xf32>
    %272 = vector.shape_cast %271 : vector<16xf32> to vector<1x16xf32>
    %cst_144 = arith.constant 6.000000e+00 : f32
    %273 = vector.broadcast %cst_144 : f32 to vector<1x16xf32>
    %274 = arith.divf %272, %273 : vector<1x16xf32>
    %c0_145 = arith.constant 0 : index
    %c0_146 = arith.constant 0 : index
    %275 = vector.load %arg35[%c0_145, %c0_146] : memref<48x48xf32, #tpu.memory_space<vmem>>, vector<48x48xf32>
    %276 = vector.extract_strided_slice %275 {offsets = [0, 0], sizes = [16, 48], strides = [1, 1]} : vector<48x48xf32> to vector<16x48xf32>
    %cst_147 = arith.constant dense<0.000000e+00> : vector<1x48xf32>
    %277 = tpu.matmul %3, %276, %cst_147 {dimension_numbers = #tpu.dot_dimension_numbers<[1], [0], [0], [1], [0, 0, 1, 1], [], []>} : vector<1x16xf32>, vector<16x48xf32>, vector<1x48xf32> -> vector<1x48xf32>
    %278 = vector.extract_strided_slice %275 {offsets = [16, 0], sizes = [16, 48], strides = [1, 1]} : vector<48x48xf32> to vector<16x48xf32>
    %cst_148 = arith.constant dense<0.000000e+00> : vector<1x48xf32>
    %279 = tpu.matmul %270, %278, %cst_148 {dimension_numbers = #tpu.dot_dimension_numbers<[1], [0], [0], [1], [0, 0, 1, 1], [], []>} : vector<1x16xf32>, vector<16x48xf32>, vector<1x48xf32> -> vector<1x48xf32>
    %280 = arith.addf %277, %279 : vector<1x48xf32>
    %281 = vector.extract_strided_slice %275 {offsets = [32, 0], sizes = [16, 48], strides = [1, 1]} : vector<48x48xf32> to vector<16x48xf32>
    %cst_149 = arith.constant dense<0.000000e+00> : vector<1x48xf32>
    %282 = tpu.matmul %274, %281, %cst_149 {dimension_numbers = #tpu.dot_dimension_numbers<[1], [0], [0], [1], [0, 0, 1, 1], [], []>} : vector<1x16xf32>, vector<16x48xf32>, vector<1x48xf32> -> vector<1x48xf32>
    %283 = arith.addf %280, %282 : vector<1x48xf32>
    %c0_150 = arith.constant 0 : index
    %c0_151 = arith.constant 0 : index
    %284 = vector.load %arg36[%c0_150, %c0_151] : memref<1x48xf32, #tpu.memory_space<vmem>>, vector<1x48xf32>
    %285 = arith.addf %283, %284 : vector<1x48xf32>
    %cst_152 = arith.constant 0.000000e+00 : f32
    %286 = vector.broadcast %cst_152 : f32 to vector<1x48xf32>
    %287 = arith.cmpf oge, %285, %286 : vector<1x48xf32>
    %cst_153 = arith.constant 1.000000e-01 : f32
    %288 = vector.broadcast %cst_153 : f32 to vector<1x48xf32>
    %289 = arith.mulf %288, %285 : vector<1x48xf32>
    %290 = arith.select %287, %285, %289 : vector<1x48xi1>, vector<1x48xf32>
    %c0_154 = arith.constant 0 : index
    %c0_155 = arith.constant 0 : index
    %291 = vector.load %arg37[%c0_154, %c0_155] : memref<48x16xf32, #tpu.memory_space<vmem>>, vector<48x16xf32>
    %cst_156 = arith.constant dense<0.000000e+00> : vector<1x16xf32>
    %292 = tpu.matmul %290, %291, %cst_156 {dimension_numbers = #tpu.dot_dimension_numbers<[1], [0], [0], [1], [0, 0, 1, 1], [], []>} : vector<1x48xf32>, vector<48x16xf32>, vector<1x16xf32> -> vector<1x16xf32>
    %c0_157 = arith.constant 0 : index
    %c0_158 = arith.constant 0 : index
    %293 = vector.load %arg38[%c0_157, %c0_158] : memref<1x16xf32, #tpu.memory_space<vmem>>, vector<1x16xf32>
    %294 = arith.addf %292, %293 : vector<1x16xf32>
    %295 = arith.mulf %294, %294 : vector<1x16xf32>
    %cst_159 = arith.constant dense<0.000000e+00> : vector<1xf32>
    %296 = vector.multi_reduction <add>, %295, %cst_159 [1] : vector<1x16xf32> to vector<1xf32>
    %297 = vector.shape_cast %296 : vector<1xf32> to vector<1x1xf32>
    %cst_160 = arith.constant 1.600000e+01 : f32
    %298 = vector.broadcast %cst_160 : f32 to vector<1x1xf32>
    %299 = arith.divf %297, %298 : vector<1x1xf32>
    %cst_161 = arith.constant 1.1920929E-7 : f32
    %300 = vector.broadcast %cst_161 : f32 to vector<1x1xf32>
    %301 = arith.addf %299, %300 : vector<1x1xf32>
    %302 = math.rsqrt %301 : vector<1x1xf32>
    %303 = vector.broadcast %302 : vector<1x1xf32> to vector<1x16xf32>
    %304 = arith.mulf %294, %303 : vector<1x16xf32>
    %c0_162 = arith.constant 0 : index
    %c0_163 = arith.constant 0 : index
    %305 = vector.load %arg39[%c0_162, %c0_163] : memref<1x16xf32, #tpu.memory_space<vmem>>, vector<1x16xf32>
    %306 = arith.mulf %304, %305 : vector<1x16xf32>
    %c0_164 = arith.constant 0 : index
    %c0_165 = arith.constant 0 : index
    %307 = vector.load %arg40[%c0_164, %c0_165] : memref<8x16xf32, #tpu.memory_space<vmem>>, vector<8x16xf32>
    tpu.vector_store %arg40[%c0_164, %c0_165], %199 {strides = array<i32>} : memref<8x16xf32, #tpu.memory_space<vmem>>, vector<8x16xf32>,
    %c0_166 = arith.constant 0 : index
    %c0_167 = arith.constant 0 : index
    %308 = vector.load %arg41[%c0_166, %c0_167] : memref<6x16xf32, #tpu.memory_space<vmem>>, vector<6x16xf32>
    tpu.vector_store %arg41[%c0_166, %c0_167], %266 {strides = array<i32>} : memref<6x16xf32, #tpu.memory_space<vmem>>, vector<6x16xf32>,
    %c0_168 = arith.constant 0 : index
    %c0_169 = arith.constant 0 : index
    %309 = vector.load %arg42[%c0_168, %c0_169] : memref<24x16xf32, #tpu.memory_space<vmem>>, vector<24x16xf32>
    tpu.vector_store %arg42[%c0_168, %c0_169], %61 {strides = array<i32>} : memref<24x16xf32, #tpu.memory_space<vmem>>, vector<24x16xf32>,
    %c0_170 = arith.constant 0 : index
    %c0_171 = arith.constant 0 : index
    %310 = vector.load %arg43[%c0_170, %c0_171] : memref<1x16xf32, #tpu.memory_space<vmem>>, vector<1x16xf32>
    tpu.vector_store %arg43[%c0_170, %c0_171], %306 {strides = array<i32>} : memref<1x16xf32, #tpu.memory_space<vmem>>, vector<1x16xf32>,
    return
  }
}

</mosaic_0001>

<llo_original>
// kernel: block_forward.1
$region0: #{block_forward.1}
  #allocation0 [shape = 'u32[]', space=smem, size = 0x4, offset = 0x4, fixed_abs, tag = 'smem constant byte address 0x4 - core index']
  #allocation1 [shape = 'u32[72,128]{1,0:T(1,128)}', space=vmem, size = 0x9000, scoped, tag = 'internal scratch']
  %s0 = inlined_call_operand.smem [shape: u32[44], index: -1, kind: input, shape index: {}]
  %s1 = sld [smem:[%s0]]
  %s2 = scalar_lea.smem %s0, 1
  %s3 = sld [smem:[%s2]]
  %s4 = scalar_lea.smem %s0, 2
  %s5 = sld [smem:[%s4]]
  %s6 = scalar_lea.smem %s0, 3
  %s7 = sld [smem:[%s6]]
  %s8 = scalar_lea.smem %s0, 4
  %s9 = sld [smem:[%s8]]
  %s10 = scalar_lea.smem %s0, 5
  %s11 = sld [smem:[%s10]]
  %s12 = scalar_lea.smem %s0, 6
  %s13 = sld [smem:[%s12]]
  %s14 = scalar_lea.smem %s0, 7
  %s15 = sld [smem:[%s14]]
  %s16 = scalar_lea.smem %s0, 8
  %s17 = sld [smem:[%s16]]
  %s18 = scalar_lea.smem %s0, 9
  %s19 = sld [smem:[%s18]]
  %s20 = scalar_lea.smem %s0, 10
  %s21 = sld [smem:[%s20]]
  %s22 = scalar_lea.smem %s0, 11
  %s23 = sld [smem:[%s22]]
  %s24 = scalar_lea.smem %s0, 12
  %s25 = sld [smem:[%s24]]
  %s26 = scalar_lea.smem %s0, 13
  %s27 = sld [smem:[%s26]]
  %s28 = scalar_lea.smem %s0, 14
  %s29 = sld [smem:[%s28]]
  %s30 = scalar_lea.smem %s0, 15
  %s31 = sld [smem:[%s30]]
  %s32 = scalar_lea.smem %s0, 16
  %s33 = sld [smem:[%s32]]
  %s34 = scalar_lea.smem %s0, 17
  %s35 = sld [smem:[%s34]]
  %s36 = scalar_lea.smem %s0, 18
  %s37 = sld [smem:[%s36]]
  %s38 = scalar_lea.smem %s0, 19
  %s39 = sld [smem:[%s38]]
  %s40 = scalar_lea.smem %s0, 20
  %s41 = sld [smem:[%s40]]
  %s42 = scalar_lea.smem %s0, 21
  %s43 = sld [smem:[%s42]]
  %s44 = scalar_lea.smem %s0, 22
  %s45 = sld [smem:[%s44]]
  %s46 = scalar_lea.smem %s0, 23
  %s47 = sld [smem:[%s46]]
  %s48 = scalar_lea.smem %s0, 24
  %s49 = sld [smem:[%s48]]
  %s50 = scalar_lea.smem %s0, 25
  %s51 = sld [smem:[%s50]]
  %s52 = scalar_lea.smem %s0, 26
  %s53 = sld [smem:[%s52]]
  %s54 = scalar_lea.smem %s0, 27
  %s55 = sld [smem:[%s54]]
  %s56 = scalar_lea.smem %s0, 28
  %s57 = sld [smem:[%s56]]
  %s58 = scalar_lea.smem %s0, 29
  %s59 = sld [smem:[%s58]]
  %s60 = scalar_lea.smem %s0, 30
  %s61 = sld [smem:[%s60]]
  %s62 = scalar_lea.smem %s0, 31
  %s63 = sld [smem:[%s62]]
  %s64 = scalar_lea.smem %s0, 32
  %s65 = sld [smem:[%s64]]
  %s66 = scalar_lea.smem %s0, 33
  %s67 = sld [smem:[%s66]]
  %s68 = scalar_lea.smem %s0, 34
  %s69 = sld [smem:[%s68]]
  %s70 = scalar_lea.smem %s0, 35
  %s71 = sld [smem:[%s70]]
  %s72 = scalar_lea.smem %s0, 36
  %s73 = sld [smem:[%s72]]
  %s74 = scalar_lea.smem %s0, 37
  %s75 = sld [smem:[%s74]]
  %s76 = scalar_lea.smem %s0, 38
  %s77 = sld [smem:[%s76]]
  %s78 = scalar_lea.smem %s0, 39
  %s79 = sld [smem:[%s78]]
  %s80 = scalar_lea.smem %s0, 40
  %s81 = sld [smem:[%s80]]
  %s82 = scalar_lea.smem %s0, 41
  %s83 = sld [smem:[%s82]]
  %s84 = scalar_lea.smem %s0, 42
  %s85 = sld [smem:[%s84]]
  %s86 = scalar_lea.smem %s0, 43
  %s87 = sld [smem:[%s86]]
  %88 = xla_tuple %s81, %s83, %s85, %s87
  %s89 = sld [smem:[#allocation0]]
  $region198: #{block_forward.1} parent=0
    _
  %s91 = ssub.s32 1, %s89
  %s92 = scalar_select 0, %s91, %s89
  $region1: #{block_forward.1} parent=0
    #allocation2 [shape = 'u8[163840]{0}', space=vmem, size = 0x28000, scoped, tag = 'input window, operand 19, single buffered']
    #allocation3 [shape = 's32[1]{0}', space=sflag, size = 0x4, scoped, tag = 'scoped memory for block_forward.1']
    #allocation4 [shape = 's32[1]{0}', space=sflag, size = 0x4, scoped, tag = 'scoped memory for block_forward.1']
    #allocation5 [shape = 'u8[4096]{0}', space=vmem, size = 0x1000, scoped, tag = 'output window, operand 0, single buffered']
    #allocation6 [shape = 'u8[4096]{0}', space=vmem, size = 0x1000, scoped, tag = 'output window, operand 1, single buffered']
    #allocation7 [shape = 's32[1]{0}', space=sflag, size = 0x4, scoped, tag = 'scoped memory for block_forward.1']
    #allocation8 [shape = 'u8[512]{0}', space=vmem, size = 0x400, scoped, tag = 'output window, operand 3, single buffered']
    %93 = vsyncpa [#allocation3], 0
    %94 = vsyncpa [#allocation4], 0
    %95 = vsyncpa [#allocation7], 0
    // Predicated region
    $region2: #{block_forward.1} parent=1 // pred_check
      _
    $region3: #{block_forward.1} parent=1 // pred_check_branch
      %97 = sbr.rel (0) target = $region5
    $region4: #{block_forward.1} parent=1 // pred_region
      _
    $region5: #{block_forward.1} parent=1 // pred_fallthru
      _
    // Predicated region
    $region6: #{block_forward.1} parent=1 // pred_check
      _
    $region7: #{block_forward.1} parent=1 // pred_check_branch
      %99 = sbr.rel (0) target = $region9
    $region8: #{block_forward.1} parent=1 // pred_region
      _
    $region9: #{block_forward.1} parent=1 // pred_fallthru
      _
    // Predicated region
    $region10: #{block_forward.1} parent=1 // pred_check
      _
    $region11: #{block_forward.1} parent=1 // pred_check_branch
      %101 = sbr.rel (0) target = $region13
    $region12: #{block_forward.1} parent=1 // pred_region
      _
    $region13: #{block_forward.1} parent=1 // pred_fallthru
      _
    // Predicated region
    $region14: #{block_forward.1} parent=1 // pred_check
      _
    $region15: #{block_forward.1} parent=1 // pred_check_branch
      %103 = sbr.rel (0) target = $region17
    $region16: #{block_forward.1} parent=1 // pred_region
      _
    $region17: #{block_forward.1} parent=1 // pred_fallthru
      _
    // Predicated region
    $region18: #{block_forward.1} parent=1 // pred_check
      _
    $region19: #{block_forward.1} parent=1 // pred_check_branch
      %105 = sbr.rel (0) target = $region21
    $region20: #{block_forward.1} parent=1 // pred_region
      _
    $region21: #{block_forward.1} parent=1 // pred_fallthru
      _
    // Predicated region
    $region22: #{block_forward.1} parent=1 // pred_check
      _
    $region23: #{block_forward.1} parent=1 // pred_check_branch
      %107 = sbr.rel (0) target = $region25
    $region24: #{block_forward.1} parent=1 // pred_region
      _
    $region25: #{block_forward.1} parent=1 // pred_fallthru
      _
    // Predicated region
    $region26: #{block_forward.1} parent=1 // pred_check
      _
    $region27: #{block_forward.1} parent=1 // pred_check_branch
      %109 = sbr.rel (0) target = $region29
    $region28: #{block_forward.1} parent=1 // pred_region
      _
    $region29: #{block_forward.1} parent=1 // pred_fallthru
      _
    // Predicated region
    $region30: #{block_forward.1} parent=1 // pred_check
      _
    $region31: #{block_forward.1} parent=1 // pred_check_branch
      %111 = sbr.rel (0) target = $region33
    $region32: #{block_forward.1} parent=1 // pred_region
      _
    $region33: #{block_forward.1} parent=1 // pred_fallthru
      _
    // Predicated region
    $region34: #{block_forward.1} parent=1 // pred_check
      _
    $region35: #{block_forward.1} parent=1 // pred_check_branch
      %113 = sbr.rel (0) target = $region37
    $region36: #{block_forward.1} parent=1 // pred_region
      _
    $region37: #{block_forward.1} parent=1 // pred_fallthru
      _
    // Predicated region
    $region38: #{block_forward.1} parent=1 // pred_check
      _
    $region39: #{block_forward.1} parent=1 // pred_check_branch
      %115 = sbr.rel (0) target = $region41
    $region40: #{block_forward.1} parent=1 // pred_region
      _
    $region41: #{block_forward.1} parent=1 // pred_fallthru
      _
    // Predicated region
    $region42: #{block_forward.1} parent=1 // pred_check
      _
    $region43: #{block_forward.1} parent=1 // pred_check_branch
      %117 = sbr.rel (0) target = $region45
    $region44: #{block_forward.1} parent=1 // pred_region
      _
    $region45: #{block_forward.1} parent=1 // pred_fallthru
      _
    // Predicated region
    $region46: #{block_forward.1} parent=1 // pred_check
      _
    $region47: #{block_forward.1} parent=1 // pred_check_branch
      %119 = sbr.rel (0) target = $region49
    $region48: #{block_forward.1} parent=1 // pred_region
      _
    $region49: #{block_forward.1} parent=1 // pred_fallthru
      _
    // Predicated region
    $region50: #{block_forward.1} parent=1 // pred_check
      _
    $region51: #{block_forward.1} parent=1 // pred_check_branch
      %121 = sbr.rel (0) target = $region53
    $region52: #{block_forward.1} parent=1 // pred_region
      _
    $region53: #{block_forward.1} parent=1 // pred_fallthru
      _
    // Predicated region
    $region54: #{block_forward.1} parent=1 // pred_check
      _
    $region55: #{block_forward.1} parent=1 // pred_check_branch
      %123 = sbr.rel (0) target = $region57
    $region56: #{block_forward.1} parent=1 // pred_region
      _
    $region57: #{block_forward.1} parent=1 // pred_fallthru
      _
    // Predicated region
    $region58: #{block_forward.1} parent=1 // pred_check
      _
    $region59: #{block_forward.1} parent=1 // pred_check_branch
      %125 = sbr.rel (0) target = $region61
    $region60: #{block_forward.1} parent=1 // pred_region
      _
    $region61: #{block_forward.1} parent=1 // pred_fallthru
      _
    // Predicated region
    $region62: #{block_forward.1} parent=1 // pred_check
      _
    $region63: #{block_forward.1} parent=1 // pred_check_branch
      %127 = sbr.rel (0) target = $region65
    $region64: #{block_forward.1} parent=1 // pred_region
      _
    $region65: #{block_forward.1} parent=1 // pred_fallthru
      _
    // Predicated region
    $region66: #{block_forward.1} parent=1 // pred_check
      _
    $region67: #{block_forward.1} parent=1 // pred_check_branch
      %129 = sbr.rel (0) target = $region69
    $region68: #{block_forward.1} parent=1 // pred_region
      _
    $region69: #{block_forward.1} parent=1 // pred_fallthru
      _
    // Predicated region
    $region70: #{block_forward.1} parent=1 // pred_check
      _
    $region71: #{block_forward.1} parent=1 // pred_check_branch
      %131 = sbr.rel (0) target = $region73
    $region72: #{block_forward.1} parent=1 // pred_region
      _
    $region73: #{block_forward.1} parent=1 // pred_fallthru
      _
    // Predicated region
    $region74: #{block_forward.1} parent=1 // pred_check
      _
    $region75: #{block_forward.1} parent=1 // pred_check_branch
      %133 = sbr.rel (0) target = $region77
    $region76: #{block_forward.1} parent=1 // pred_region
      _
    $region77: #{block_forward.1} parent=1 // pred_fallthru
      _
    // Predicated region
    $region78: #{block_forward.1} parent=1 // pred_check
      _
    $region79: #{block_forward.1} parent=1 // pred_check_branch
      %135 = sbr.rel (0) target = $region81
    $region80: #{block_forward.1} parent=1 // pred_region
      %137 = vsyncadd [#allocation3], 0
      %s138 = sshll.u32 %s39, 4
      %s139 = int_to_ptr.hbm [resolvable:$true] %s138
      %s140 = sshll.u32 [#allocation2], 4
      %s141 = int_to_ptr.vmem [resolvable:$true] %s140
      %146 = dma.hbm_to_vmem [thread:$0]  %s139, 5120, %s141, [#allocation3], 256, 256, 16
    $region81: #{block_forward.1} parent=1 // pred_fallthru
      _
    // Predicated region
    $region82: #{block_forward.1} parent=1 // pred_check
      _
    $region83: #{block_forward.1} parent=1 // pred_check_branch
      %148 = sbr.rel (0) target = $region85
    $region84: #{block_forward.1} parent=1 // pred_region
      _
    $region85: #{block_forward.1} parent=1 // pred_fallthru
      _
    // Predicated region
    $region86: #{block_forward.1} parent=1 // pred_check
      _
    $region87: #{block_forward.1} parent=1 // pred_check_branch
      %150 = sbr.rel (0) target = $region89
    $region88: #{block_forward.1} parent=1 // pred_region
      _
    $region89: #{block_forward.1} parent=1 // pred_fallthru
      _
    // Predicated region
    $region90: #{block_forward.1} parent=1 // pred_check
      _
    $region91: #{block_forward.1} parent=1 // pred_check_branch
      %152 = sbr.rel (0) target = $region93
    $region92: #{block_forward.1} parent=1 // pred_region
      _
    $region93: #{block_forward.1} parent=1 // pred_fallthru
      _
    // Predicated region
    $region94: #{block_forward.1} parent=1 // pred_check
      _
    $region95: #{block_forward.1} parent=1 // pred_check_branch
      %154 = sbr.rel (0) target = $region97
    $region96: #{block_forward.1} parent=1 // pred_region
      _
    $region97: #{block_forward.1} parent=1 // pred_fallthru
      _
    // Predicated region
    $region98: #{block_forward.1} parent=1 // pred_check
      _
    $region99: #{block_forward.1} parent=1 // pred_check_branch
      %156 = sbr.rel (0) target = $region101
    $region100: #{block_forward.1} parent=1 // pred_region
      _
    $region101: #{block_forward.1} parent=1 // pred_fallthru
      _
    // Predicated region
    $region102: #{block_forward.1} parent=1 // pred_check
      _
    $region103: #{block_forward.1} parent=1 // pred_check_branch
      %158 = sbr.rel (0) target = $region105
    $region104: #{block_forward.1} parent=1 // pred_region
      _
    $region105: #{block_forward.1} parent=1 // pred_fallthru
      _
    // Predicated region
    $region106: #{block_forward.1} parent=1 // pred_check
      _
    $region107: #{block_forward.1} parent=1 // pred_check_branch
      %160 = sbr.rel (0) target = $region109
    $region108: #{block_forward.1} parent=1 // pred_region
      _
    $region109: #{block_forward.1} parent=1 // pred_fallthru
      _
    // Predicated region
    $region110: #{block_forward.1} parent=1 // pred_check
      _
    $region111: #{block_forward.1} parent=1 // pred_check_branch
      %162 = sbr.rel (0) target = $region113
    $region112: #{block_forward.1} parent=1 // pred_region
      _
    $region113: #{block_forward.1} parent=1 // pred_fallthru
      _
    // Predicated region
    $region114: #{block_forward.1} parent=1 // pred_check
      _
    $region115: #{block_forward.1} parent=1 // pred_check_branch
      %164 = sbr.rel (0) target = $region117
    $region116: #{block_forward.1} parent=1 // pred_region
      _
    $region117: #{block_forward.1} parent=1 // pred_fallthru
      _
    // Predicated region
    $region118: #{block_forward.1} parent=1 // pred_check
      _
    $region119: #{block_forward.1} parent=1 // pred_check_branch
      %166 = sbr.rel (0) target = $region121
    $region120: #{block_forward.1} parent=1 // pred_region
      _
    $region121: #{block_forward.1} parent=1 // pred_fallthru
      _
    // Predicated region
    $region122: #{block_forward.1} parent=1 // pred_check
      _
    $region123: #{block_forward.1} parent=1 // pred_check_branch
      %168 = sbr.rel (0) target = $region125
    $region124: #{block_forward.1} parent=1 // pred_region
      _
    $region125: #{block_forward.1} parent=1 // pred_fallthru
      _
    // Predicated region
    $region126: #{block_forward.1} parent=1 // pred_check
      _
    $region127: #{block_forward.1} parent=1 // pred_check_branch
      %170 = sbr.rel (0) target = $region129
    $region128: #{block_forward.1} parent=1 // pred_region
      _
    $region129: #{block_forward.1} parent=1 // pred_fallthru
      _
    // Predicated region
    $region130: #{block_forward.1} parent=1 // pred_check
      _
    $region131: #{block_forward.1} parent=1 // pred_check_branch
      %172 = sbr.rel (0) target = $region133
    $region132: #{block_forward.1} parent=1 // pred_region
      _
    $region133: #{block_forward.1} parent=1 // pred_fallthru
      _
    // Predicated region
    $region134: #{block_forward.1} parent=1 // pred_check
      _
    $region135: #{block_forward.1} parent=1 // pred_check_branch
      %174 = sbr.rel (0) target = $region137
    $region136: #{block_forward.1} parent=1 // pred_region
      _
    $region137: #{block_forward.1} parent=1 // pred_fallthru
      _
    // Predicated region
    $region138: #{block_forward.1} parent=1 // pred_check
      _
    $region139: #{block_forward.1} parent=1 // pred_check_branch
      %176 = sbr.rel (0) target = $region141
    $region140: #{block_forward.1} parent=1 // pred_region
      _
    $region141: #{block_forward.1} parent=1 // pred_fallthru
      _
    // Predicated region
    $region142: #{block_forward.1} parent=1 // pred_check
      _
    $region143: #{block_forward.1} parent=1 // pred_check_branch
      %178 = sbr.rel (0) target = $region145
    $region144: #{block_forward.1} parent=1 // pred_region
      _
    $region145: #{block_forward.1} parent=1 // pred_fallthru
      _
    // Predicated region
    $region146: #{block_forward.1} parent=1 // pred_check
      _
    $region147: #{block_forward.1} parent=1 // pred_check_branch
      %180 = sbr.rel (0) target = $region149
    $region148: #{block_forward.1} parent=1 // pred_region
      _
    $region149: #{block_forward.1} parent=1 // pred_fallthru
      _
    // Predicated region
    $region150: #{block_forward.1} parent=1 // pred_check
      _
    $region151: #{block_forward.1} parent=1 // pred_check_branch
      %182 = sbr.rel (0) target = $region153
    $region152: #{block_forward.1} parent=1 // pred_region
      _
    $region153: #{block_forward.1} parent=1 // pred_fallthru
      _
    // Predicated region
    $region154: #{block_forward.1} parent=1 // pred_check
      _
    $region155: #{block_forward.1} parent=1 // pred_check_branch
      %184 = sbr.rel (0) target = $region157
    $region156: #{block_forward.1} parent=1 // pred_region
      _
    $region157: #{block_forward.1} parent=1 // pred_fallthru
      _
    // Predicated region
    $region158: #{block_forward.1} parent=1 // pred_check
      _
    $region159: #{block_forward.1} parent=1 // pred_check_branch
      %186 = sbr.rel (0) target = $region161
    $region160: #{block_forward.1} parent=1 // pred_region
      _
    $region161: #{block_forward.1} parent=1 // pred_fallthru
      _
    // Predicated region
    $region162: #{block_forward.1} parent=1 // pred_check
      _
    $region163: #{block_forward.1} parent=1 // pred_check_branch
      %188 = sbr.rel (0) target = $region165
    $region164: #{block_forward.1} parent=1 // pred_region
      %190 = dma.done [#allocation3], 5120
    $region165: #{block_forward.1} parent=1 // pred_fallthru
      _
    %v191 = vld [vmem:[%s1] sm:$0xff]
    %v192 = vld [vmem:[%s3] sm:$0x3f]
    %v193 = vld [vmem:[%s5] sm:$0xff]
    %v194 = vld [vmem:[%s5 + $0x8] sm:$0xff]
    %v195 = vld [vmem:[%s5 + $0x10] sm:$0xff]
    %v196 = vld [vmem:[%s7] sm:$0x1]
    %v197 = vld [vmem:[%s9] sm:$0xff]
    %v198 = vld [vmem:[%s9 + $0x8] sm:$0xff]
    %v199 = vld [vmem:[%s9 + $0x10] sm:$0xff]
    %v200 = vld [vmem:[%s11] sm:$0xff]
    %v201 = vld [vmem:[%s13] sm:$0xff]
    %v202 = vld [vmem:[%s13 + $0x8] sm:$0xff]
    %v203 = vld [vmem:[%s13 + $0x10] sm:$0xff]
    %v204 = vld [vmem:[%s15] sm:$0x3f]
    %v205 = vld [vmem:[%s17] sm:$0xff]
    %v206 = vmax.f32 %v205, 1.0
    %vm207 = vcmask 64512
    %v209 = vsel %vm207, %v197, 0
    %v212 = vsel %vm207, %v198, 0
    %v215 = vsel %vm207, %v199, 0
    %217 = vmatpush.msra.mxu0 0.0
    %218 = vmatpush.msra.mxu0 0.0
    %219 = vmatpush.msra.mxu0 0.0
    %220 = vmatpush.msra.mxu0 0.0
    %221 = vmatpush.msra.mxu0 0.0
    %222 = vmatpush.msra.mxu0 0.0
    %223 = vmatpush.msra.mxu0 0.0
    %224 = vmatpush.msra.mxu0 0.0
    %225 = vmatpush.msra.mxu0 0.0
    %226 = vmatpush.msra.mxu0 0.0
    %227 = vmatpush.msra.mxu0 0.0
    %228 = vmatpush.msra.mxu0 0.0
    %229 = vmatpush.msra.mxu0 0.0
    %230 = vmatpush.msra.mxu0 0.0
    %231 = vmatpush.msra.mxu0 0.0
    %232 = vmatpush.msra.mxu0 %v191
    %233 = vmatmul.f32.gmra.mxu0 %v209
    %v234 = vpop.f32.mrf.mxu0
    %v235 = vadd.f32 0.0, %v234
    %236 = vmatmul.f32.gmra.mxu0 %v212
    %v237 = vpop.f32.mrf.mxu0
    %v238 = vadd.f32 0.0, %v237
    %239 = vmatmul.f32.gmra.mxu0 %v215
    %v240 = vpop.f32.mrf.mxu0
    %v241 = vadd.f32 0.0, %v240
    %242 = vdwg.mxu0
    %vm243 = vcmask 48128
    %v245 = vsel %vm243, %v201, 0
    %v248 = vsel %vm243, %v202, 0
    %v251 = vsel %vm243, %v203, 0
    %vm253 = vcmask 1045504
    %v255 = vsel %vm253, %v192, 0
    %257 = vmatpush.msra.mxu0 0.0
    %258 = vmatpush.msra.mxu0 0.0
    %259 = vmatpush.msra.mxu0 0.0
    %260 = vmatpush.msra.mxu0 0.0
    %261 = vmatpush.msra.mxu0 0.0
    %262 = vmatpush.msra.mxu0 0.0
    %263 = vmatpush.msra.mxu0 0.0
    %264 = vmatpush.msra.mxu0 0.0
    %265 = vmatpush.msra.mxu0 0.0
    %266 = vmatpush.msra.mxu0 0.0
    %267 = vmatpush.msra.mxu0 0.0
    %268 = vmatpush.msra.mxu0 0.0
    %269 = vmatpush.msra.mxu0 0.0
    %270 = vmatpush.msra.mxu0 0.0
    %271 = vmatpush.msra.mxu0 0.0
    %272 = vmatpush.msra.mxu0 %v255
    %273 = vmatmul.f32.gmra.mxu0 %v245
    %v274 = vpop.f32.mrf.mxu0
    %v275 = vadd.f32 0.0, %v274
    %276 = vmatmul.f32.gmra.mxu0 %v248
    %v277 = vpop.f32.mrf.mxu0
    %v278 = vadd.f32 0.0, %v277
    %279 = vmatmul.f32.gmra.mxu0 %v251
    %v280 = vpop.f32.mrf.mxu0
    %v281 = vadd.f32 0.0, %v280
    %282 = vdwg.mxu0
    %v283 = vld [vmem:[%s19] sm:$0xff]
    %v284 = vld [vmem:[%s19 + $0x8] sm:$0xff]
    %v285 = vld [vmem:[%s19 + $0x10] sm:$0xff]
    %v286 = vld [vmem:[%s19 + $0x18] sm:$0xff]
    %v287 = vld [vmem:[%s19 + $0x20] sm:$0xff]
    %v288 = vld [vmem:[%s19 + $0x28] sm:$0xff]
    %v289 = vld [vmem:[%s19 + $0x30] sm:$0xff]
    %v290 = vld [vmem:[%s19 + $0x38] sm:$0xff]
    %vm291 = vcmask 130048
    %v293 = vsel %vm291, %v275, 0
    %v296 = vsel %vm291, %v278, 0
    %v299 = vsel %vm291, %v281, 0
    %301 = vmatpush.msra.mxu0 0.0
    %302 = vmatpush.msra.mxu0 0.0
    %303 = vmatpush.msra.mxu0 0.0
    %304 = vmatpush.msra.mxu0 0.0
    %305 = vmatpush.msra.mxu0 0.0
    %306 = vmatpush.msra.mxu0 0.0
    %307 = vmatpush.msra.mxu0 0.0
    %308 = vmatpush.msra.mxu0 0.0
    %309 = vmatpush.msra.mxu0 0.0
    %310 = vmatpush.msra.mxu0 0.0
    %311 = vmatpush.msra.mxu0 0.0
    %312 = vmatpush.msra.mxu0 0.0
    %313 = vmatpush.msra.mxu0 0.0
    %314 = vmatpush.msra.mxu0 0.0
    %315 = vmatpush.msra.mxu0 %v286
    %316 = vmatpush.msra.mxu0 %v285
    %317 = vmatmul.f32.gmra.mxu0 %v293
    %v318 = vpop.f32.mrf.mxu0
    %v319 = vadd.f32 0.0, %v318
    %320 = vmatmul.f32.gmra.mxu0 %v296
    %v321 = vpop.f32.mrf.mxu0
    %v322 = vadd.f32 0.0, %v321
    %323 = vmatmul.f32.gmra.mxu0 %v299
    %v324 = vpop.f32.mrf.mxu0
    %v325 = vadd.f32 0.0, %v324
    %326 = vdwg.mxu0
    %v328 = vsel %vm291, %v235, 0
    %v331 = vsel %vm291, %v238, 0
    %v334 = vsel %vm291, %v241, 0
    %336 = vmatpush.msra.mxu0 0.0
    %337 = vmatpush.msra.mxu0 0.0
    %338 = vmatpush.msra.mxu0 0.0
    %339 = vmatpush.msra.mxu0 0.0
    %340 = vmatpush.msra.mxu0 0.0
    %341 = vmatpush.msra.mxu0 0.0
    %342 = vmatpush.msra.mxu0 0.0
    %343 = vmatpush.msra.mxu0 0.0
    %344 = vmatpush.msra.mxu0 0.0
    %345 = vmatpush.msra.mxu0 0.0
    %346 = vmatpush.msra.mxu0 0.0
    %347 = vmatpush.msra.mxu0 0.0
    %348 = vmatpush.msra.mxu0 0.0
    %349 = vmatpush.msra.mxu0 0.0
    %350 = vmatpush.msra.mxu0 %v284
    %351 = vmatpush.msra.mxu0 %v283
    %352 = vmatmul.f32.gmra.mxu0 %v328
    %v353 = vpop.f32.mrf.mxu0
    %v354 = vadd.f32 %v319, %v353
    %355 = vmatmul.f32.gmra.mxu0 %v331
    %v356 = vpop.f32.mrf.mxu0
    %v357 = vadd.f32 %v322, %v356
    %358 = vmatmul.f32.gmra.mxu0 %v334
    %v359 = vpop.f32.mrf.mxu0
    %v360 = vadd.f32 %v325, %v359
    %361 = vdwg.mxu0
    %v363 = vsel %vm291, %v193, 0
    %v366 = vsel %vm291, %v194, 0
    %v369 = vsel %vm291, %v195, 0
    %371 = vmatpush.msra.mxu0 0.0
    %372 = vmatpush.msra.mxu0 0.0
    %373 = vmatpush.msra.mxu0 0.0
    %374 = vmatpush.msra.mxu0 0.0
    %375 = vmatpush.msra.mxu0 0.0
    %376 = vmatpush.msra.mxu0 0.0
    %377 = vmatpush.msra.mxu0 0.0
    %378 = vmatpush.msra.mxu0 0.0
    %379 = vmatpush.msra.mxu0 0.0
    %380 = vmatpush.msra.mxu0 0.0
    %381 = vmatpush.msra.mxu0 0.0
    %382 = vmatpush.msra.mxu0 0.0
    %383 = vmatpush.msra.mxu0 0.0
    %384 = vmatpush.msra.mxu0 0.0
    %385 = vmatpush.msra.mxu0 %v288
    %386 = vmatpush.msra.mxu0 %v287
    %387 = vmatmul.f32.gmra.mxu0 %v363
    %v388 = vpop.f32.mrf.mxu0
    %v389 = vadd.f32 0.0, %v388
    %390 = vmatmul.f32.gmra.mxu0 %v366
    %v391 = vpop.f32.mrf.mxu0
    %v392 = vadd.f32 0.0, %v391
    %393 = vmatmul.f32.gmra.mxu0 %v369
    %v394 = vpop.f32.mrf.mxu0
    %v395 = vadd.f32 0.0, %v394
    %396 = vdwg.mxu0
    %v397 = vadd.f32 %v354, %v389
    %v398 = vadd.f32 %v357, %v392
    %v399 = vadd.f32 %v360, %v395
    %v400 = vld [vmem:[%s21] sm:$0x1]
    %v402 = vsel %vm291, %v196, 0
    %404 = vmatpush.msra.mxu0 0.0
    %405 = vmatpush.msra.mxu0 0.0
    %406 = vmatpush.msra.mxu0 0.0
    %407 = vmatpush.msra.mxu0 0.0
    %408 = vmatpush.msra.mxu0 0.0
    %409 = vmatpush.msra.mxu0 0.0
    %410 = vmatpush.msra.mxu0 0.0
    %411 = vmatpush.msra.mxu0 0.0
    %412 = vmatpush.msra.mxu0 0.0
    %413 = vmatpush.msra.mxu0 0.0
    %414 = vmatpush.msra.mxu0 0.0
    %415 = vmatpush.msra.mxu0 0.0
    %416 = vmatpush.msra.mxu0 0.0
    %417 = vmatpush.msra.mxu0 0.0
    %418 = vmatpush.msra.mxu0 %v290
    %419 = vmatpush.msra.mxu0 %v289
    %420 = vmatmul.f32.gmra.mxu0 %v402
    %v421 = vpop.f32.mrf.mxu0
    %v422 = vadd.f32 %v400, %v421
    %423 = vdwg.mxu0
    %v424 = vperm.slane %v422, 0
    %v425 = vadd.f32 %v397, %v424
    %v426 = vadd.f32 %v398, %v424
    %v427 = vadd.f32 %v399, %v424
    %vm428 = vcmp.ge.f32.partialorder %v425, 0.0
    %vm429 = vcmp.ge.f32.partialorder %v426, 0.0
    %vm430 = vcmp.ge.f32.partialorder %v427, 0.0
    %v431 = vmul.f32 %v425, 0.1
    %v432 = vmul.f32 %v426, 0.1
    %v433 = vmul.f32 %v427, 0.1
    %v434 = vsel %vm428, %v425, %v431
    %v435 = vsel %vm429, %v426, %v432
    %v436 = vsel %vm430, %v427, %v433
    %v437 = vld [vmem:[%s23] sm:$0xff]
    %v438 = vld [vmem:[%s23 + $0x8] sm:$0xff]
    %v439 = vld [vmem:[%s23 + $0x10] sm:$0xff]
    %v440 = vld [vmem:[%s23 + $0x18] sm:$0xff]
    %v441 = vld [vmem:[%s23 + $0x20] sm:$0xff]
    %v442 = vld [vmem:[%s23 + $0x28] sm:$0xff]
    %v443 = vld [vmem:[%s23 + $0x30] sm:$0xff]
    %v444 = vld [vmem:[%s23 + $0x38] sm:$0xff]
    %v445 = vld [vmem:[%s25] sm:$0x1]
    %v447 = vperm.slane %v445, 0
    %vm449 = vcmask 523264
    %v451 = vsel %vm449, %v434, 0
    %v454 = vsel %vm449, %v435, 0
    %v457 = vsel %vm449, %v436, 0
    %459 = vmatpush.msra.mxu0 0.0
    %460 = vmatpush.msra.mxu0 0.0
    %461 = vmatpush.msra.mxu0 0.0
    %462 = vmatpush.msra.mxu0 0.0
    %463 = vmatpush.msra.mxu0 0.0
    %464 = vmatpush.msra.mxu0 0.0
    %465 = vmatpush.msra.mxu0 0.0
    %466 = vmatpush.msra.mxu0 0.0
    %467 = vmatpush.msra.mxu0 %v444
    %468 = vmatpush.msra.mxu0 %v443
    %469 = vmatpush.msra.mxu0 %v442
    %470 = vmatpush.msra.mxu0 %v441
    %471 = vmatpush.msra.mxu0 %v440
    %472 = vmatpush.msra.mxu0 %v439
    %473 = vmatpush.msra.mxu0 %v438
    %474 = vmatpush.msra.mxu0 %v437
    %475 = vmatmul.f32.gmra.mxu0 %v451
    %v476 = vpop.f32.mrf.mxu0
    %v477 = vadd.f32 %v447, %v476
    %478 = vmatmul.f32.gmra.mxu0 %v454
    %v479 = vpop.f32.mrf.mxu0
    %v480 = vadd.f32 %v447, %v479
    %481 = vmatmul.f32.gmra.mxu0 %v457
    %v482 = vpop.f32.mrf.mxu0
    %v483 = vadd.f32 %v447, %v482
    %484 = vdwg.mxu0
    %v485 = vld [vmem:[%s27] sm:$0x1]
    %v486 = vld [vmem:[%s29] sm:$0x1]
    %v487 = vsel %vm291, %v477, 0.0
    %v488 = vsel %vm291, %v480, 0.0
    %v489 = vadd.f32 %v487, %v488
    %v490 = vsel %vm291, %v483, 0.0
    %v491 = vadd.f32 %v489, %v490
    %v492 = vrot.slane %v491, 4
    %v493 = vadd.f32 %v491, %v492
    %v494 = vrot.slane %v493, 2
    %v495 = vadd.f32 %v493, %v494
    %v496 = vrot.slane %v495, 1
    %v497 = vadd.f32 %v495, %v496
    %v498 = vrcp.pop 24.0
    %v499 = vmul.f32 24.0, %v498
    %v500 = vsub.f32 1.0, %v499
    %v501 = vmul.f32 %v498, %v500
    %v502 = vadd.f32 %v498, %v501
    %vm503 = vweird.f32 %v498
    %v504 = vsel %vm503, %v498, %v502
    %v505 = vmul.f32 %v497, %v504
    %v506 = vsub.f32 %v477, %v505
    %v507 = vsub.f32 %v480, %v505
    %v508 = vsub.f32 %v483, %v505
    %v509 = vmul.f32 %v506, %v506
    %v510 = vmul.f32 %v507, %v507
    %v511 = vmul.f32 %v508, %v508
    %v512 = vsel %vm291, %v509, 0.0
    %v513 = vsel %vm291, %v510, 0.0
    %v514 = vadd.f32 %v512, %v513
    %v515 = vsel %vm291, %v511, 0.0
    %v516 = vadd.f32 %v514, %v515
    %v517 = vrot.slane %v516, 4
    %v518 = vadd.f32 %v516, %v517
    %v519 = vrot.slane %v518, 2
    %v520 = vadd.f32 %v518, %v519
    %v521 = vrot.slane %v520, 1
    %v522 = vadd.f32 %v520, %v521
    %v523 = vmul.f32 %v522, %v504
    %v524 = vadd.f32 %v523, 1e-05
    %v525 = vrsqrt.pop %v524
    %v526 = vmul.f32 %v525, %v524
    %v527 = vmul.f32 %v526, %v525
    %v528 = vmul.f32 0.5, %v527
    %v529 = vsub.f32 1.5, %v528
    %v530 = vmul.f32 %v525, %v529
    %vm531 = vweird.f32 %v524
    %vm532 = vweird.f32 %v525
    %vm533 = vmor %vm531, %vm532
    %v534 = vsel %vm533, %v525, %v530
    %v535 = vmul.f32 %v506, %v534
    %v536 = vmul.f32 %v507, %v534
    %v537 = vmul.f32 %v508, %v534
    %v539 = vperm.slane %v485, 0
    %v541 = vmul.f32 %v535, %v539
    %v542 = vmul.f32 %v536, %v539
    %v543 = vmul.f32 %v537, %v539
    %v545 = vperm.slane %v486, 0
    %v547 = vadd.f32 %v541, %v545
    %v548 = vadd.f32 %v542, %v545
    %v549 = vadd.f32 %v543, %v545
    %v550 = vld [vmem:[%s31] sm:$0xff]
    %v551 = vld [vmem:[%s31 + $0x8] sm:$0xff]
    %v552 = vld [vmem:[%s31 + $0x10] sm:$0xff]
    %v553 = vld [vmem:[%s31 + $0x18] sm:$0xff]
    %v555 = vsel %vm291, %v547, 0
    %v558 = vsel %vm291, %v548, 0
    %v561 = vsel %vm291, %v549, 0
    %563 = vmatpush.msra.mxu0 0.0
    %564 = vmatpush.msra.mxu0 0.0
    %565 = vmatpush.msra.mxu0 0.0
    %566 = vmatpush.msra.mxu0 0.0
    %567 = vmatpush.msra.mxu0 0.0
    %568 = vmatpush.msra.mxu0 0.0
    %569 = vmatpush.msra.mxu0 0.0
    %570 = vmatpush.msra.mxu0 0.0
    %571 = vmatpush.msra.mxu0 0.0
    %572 = vmatpush.msra.mxu0 0.0
    %573 = vmatpush.msra.mxu0 0.0
    %574 = vmatpush.msra.mxu0 0.0
    %575 = vmatpush.msra.mxu0 0.0
    %576 = vmatpush.msra.mxu0 0.0
    %577 = vmatpush.msra.mxu0 %v553
    %578 = vmatpush.msra.mxu0 %v552
    %579 = vmatmul.f32.gmra.mxu0 %v555
    %v580 = vpop.f32.mrf.mxu0
    %v581 = vadd.f32 0.0, %v580
    %582 = vmatmul.f32.gmra.mxu0 %v558
    %v583 = vpop.f32.mrf.mxu0
    %v584 = vadd.f32 0.0, %v583
    %585 = vmatmul.f32.gmra.mxu0 %v561
    %v586 = vpop.f32.mrf.mxu0
    %v587 = vadd.f32 0.0, %v586
    %588 = vdwg.mxu0
    %589 = vmatpush.msra.mxu0 0.0
    %590 = vmatpush.msra.mxu0 0.0
    %591 = vmatpush.msra.mxu0 0.0
    %592 = vmatpush.msra.mxu0 0.0
    %593 = vmatpush.msra.mxu0 0.0
    %594 = vmatpush.msra.mxu0 0.0
    %595 = vmatpush.msra.mxu0 0.0
    %596 = vmatpush.msra.mxu0 0.0
    %597 = vmatpush.msra.mxu0 0.0
    %598 = vmatpush.msra.mxu0 0.0
    %599 = vmatpush.msra.mxu0 0.0
    %600 = vmatpush.msra.mxu0 0.0
    %601 = vmatpush.msra.mxu0 0.0
    %602 = vmatpush.msra.mxu0 0.0
    %603 = vmatpush.msra.mxu0 %v551
    %604 = vmatpush.msra.mxu0 %v550
    %605 = vmatmul.f32.gmra.mxu0 %v293
    %v606 = vpop.f32.mrf.mxu0
    %v607 = vadd.f32 %v581, %v606
    %608 = vmatmul.f32.gmra.mxu0 %v296
    %v609 = vpop.f32.mrf.mxu0
    %v610 = vadd.f32 %v584, %v609
    %611 = vmatmul.f32.gmra.mxu0 %v299
    %v612 = vpop.f32.mrf.mxu0
    %v613 = vadd.f32 %v587, %v612
    %614 = vdwg.mxu0
    %v615 = vld [vmem:[%s33] sm:$0x1]
    %v617 = vperm.slane %v615, 0
    %v619 = vadd.f32 %v607, %v617
    %v620 = vadd.f32 %v610, %v617
    %v621 = vadd.f32 %v613, %v617
    %vm622 = vcmp.ge.f32.partialorder %v619, 0.0
    %vm623 = vcmp.ge.f32.partialorder %v620, 0.0
    %vm624 = vcmp.ge.f32.partialorder %v621, 0.0
    %v625 = vmul.f32 %v619, 0.1
    %v626 = vmul.f32 %v620, 0.1
    %v627 = vmul.f32 %v621, 0.1
    %v628 = vsel %vm622, %v619, %v625
    %v629 = vsel %vm623, %v620, %v626
    %v630 = vsel %vm624, %v621, %v627
    %v631 = vld [vmem:[%s35] sm:$0xff]
    %v632 = vld [vmem:[%s35 + $0x8] sm:$0xff]
    %v633 = vld [vmem:[%s35 + $0x10] sm:$0xff]
    %v634 = vld [vmem:[%s35 + $0x18] sm:$0xff]
    %v635 = vld [vmem:[%s37] sm:$0x1]
    %v637 = vperm.slane %v635, 0
    %vm639 = vcmask 261120
    %v641 = vsel %vm639, %v628, 0
    %v644 = vsel %vm639, %v629, 0
    %v647 = vsel %vm639, %v630, 0
    %649 = vmatpush.msra.mxu0 0.0
    %650 = vmatpush.msra.mxu0 0.0
    %651 = vmatpush.msra.mxu0 0.0
    %652 = vmatpush.msra.mxu0 0.0
    %653 = vmatpush.msra.mxu0 0.0
    %654 = vmatpush.msra.mxu0 0.0
    %655 = vmatpush.msra.mxu0 0.0
    %656 = vmatpush.msra.mxu0 0.0
    %657 = vmatpush.msra.mxu0 0.0
    %658 = vmatpush.msra.mxu0 0.0
    %659 = vmatpush.msra.mxu0 0.0
    %660 = vmatpush.msra.mxu0 0.0
    %661 = vmatpush.msra.mxu0 %v634
    %662 = vmatpush.msra.mxu0 %v633
    %663 = vmatpush.msra.mxu0 %v632
    %664 = vmatpush.msra.mxu0 %v631
    %665 = vmatmul.f32.gmra.mxu0 %v641
    %v666 = vpop.f32.mrf.mxu0
    %v667 = vadd.f32 %v637, %v666
    %668 = vmatmul.f32.gmra.mxu0 %v644
    %v669 = vpop.f32.mrf.mxu0
    %v670 = vadd.f32 %v637, %v669
    %671 = vmatmul.f32.gmra.mxu0 %v647
    %v672 = vpop.f32.mrf.mxu0
    %v673 = vadd.f32 %v637, %v672
    %674 = vdwg.mxu0
    %vm675 = vcmask 195584
    %v677 = vsel %vm675, %v200, 0
    %679 = vmatpush.msra.mxu0 0.0
    %680 = vmatpush.msra.mxu0 0.0
    %681 = vmatpush.msra.mxu0 0.0
    %682 = vmatpush.msra.mxu0 0.0
    %683 = vmatpush.msra.mxu0 0.0
    %684 = vmatpush.msra.mxu0 0.0
    %685 = vmatpush.msra.mxu0 0.0
    %686 = vmatpush.msra.mxu0 0.0
    %687 = vmatpush.msra.mxu0 0.0
    %688 = vmatpush.msra.mxu0 0.0
    %689 = vmatpush.msra.mxu0 0.0
    %690 = vmatpush.msra.mxu0 0.0
    %691 = vmatpush.msra.mxu0 0.0
    %692 = vmatpush.msra.mxu0 %v673
    %693 = vmatpush.msra.mxu0 %v670
    %694 = vmatpush.msra.mxu0 %v667
    %695 = vmatmul.f32.gmra.mxu0 %v677
    %v696 = vpop.f32.mrf.mxu0
    %v697 = vadd.f32 0.0, %v696
    %698 = vdwg.mxu0
    %v699 = vmul.f32 %v667, %v667
    %v700 = vmul.f32 %v670, %v670
    %v701 = vmul.f32 %v673, %v673
    %702 = vmatpush.msra.mxu0 0.0
    %703 = vmatpush.msra.mxu0 0.0
    %704 = vmatpush.msra.mxu0 0.0
    %705 = vmatpush.msra.mxu0 0.0
    %706 = vmatpush.msra.mxu0 0.0
    %707 = vmatpush.msra.mxu0 0.0
    %708 = vmatpush.msra.mxu0 0.0
    %709 = vmatpush.msra.mxu0 0.0
    %710 = vmatpush.msra.mxu0 0.0
    %711 = vmatpush.msra.mxu0 0.0
    %712 = vmatpush.msra.mxu0 0.0
    %713 = vmatpush.msra.mxu0 0.0
    %714 = vmatpush.msra.mxu0 0.0
    %715 = vmatpush.msra.mxu0 %v701
    %716 = vmatpush.msra.mxu0 %v700
    %717 = vmatpush.msra.mxu0 %v699
    %718 = vmatmul.f32.gmra.mxu0 %v677
    %v719 = vpop.f32.mrf.mxu0
    %v720 = vadd.f32 0.0, %v719
    %721 = vdwg.mxu0
    %723 = vset.pattern.permute.xlu0 0
    %724 = vperm.xlu0 %723, %v206
    %v725 = vpop.permute.xlu0 %724
    %v727 = vrcp.pop %v725
    %v728 = vmul.f32 %v725, %v727
    %v729 = vsub.f32 1.0, %v728
    %v730 = vmul.f32 %v727, %v729
    %v731 = vadd.f32 %v727, %v730
    %vm732 = vweird.f32 %v725
    %vm733 = vweird.f32 %v727
    %vm734 = vmor %vm732, %vm733
    %v735 = vsel %vm734, %v727, %v731
    %v736 = vand.u32 2147483647, %v725
    %vm737 = vcmp.eq.f32.partialorder %v736, 8.507059e+37
    %v738 = vand.u32 %v725, 2147483648
    %v739 = vor.u32 1.1754944e-38, %v738
    %v740 = vsel %vm737, %v739, %v735
    %v741 = vmul.f32 %v697, %v740
    %v742 = vmul.f32 %v720, %v740
    %v743 = vmul.f32 %v741, %v741
    %v744 = vsub.f32 %v742, %v743
    %vm745 = vcmp.ge.f32.partialorder %v744, 0.0
    %v746 = vmul.f32 %v744, 0.01
    %v747 = vsel %vm745, %v744, %v746
    %v748 = vadd.f32 %v747, 1e-06
    %v749 = vrsqrt.pop %v748
    %v750 = vmul.f32 %v749, %v748
    %v751 = vmul.f32 %v750, %v749
    %v752 = vmul.f32 0.5, %v751
    %v753 = vsub.f32 1.5, %v752
    %v754 = vmul.f32 %v749, %v753
    %v755 = vmul.f32 %v748, %v754
    %vm756 = vcmp.eq.f32.partialorder %v748, inf
    %v757 = vsel %vm756, %v748, %v755
    %vm758 = vcmp.eq.f32.partialorder %v748, 0.0
    %v759 = vand.u32 %v748, 2147483648
    %v760 = vsel %vm758, %v759, %v757
    %761 = vmatpush.msra.mxu0 0.0
    %762 = vmatpush.msra.mxu0 0.0
    %763 = vmatpush.msra.mxu0 0.0
    %764 = vmatpush.msra.mxu0 0.0
    %765 = vmatpush.msra.mxu0 0.0
    %766 = vmatpush.msra.mxu0 0.0
    %767 = vmatpush.msra.mxu0 0.0
    %768 = vmatpush.msra.mxu0 0.0
    %769 = vmatpush.msra.mxu0 0.0
    %770 = vmatpush.msra.mxu0 0.0
    %771 = vmatpush.msra.mxu0 0.0
    %772 = vmatpush.msra.mxu0 0.0
    %773 = vmatpush.msra.mxu0 0.0
    %774 = vmatpush.msra.mxu0 0.0
    %775 = vmatpush.msra.mxu0 0.0
    %776 = vmatpush.msra.mxu0 %v741
    %777 = vmatmul.f32.gmra.mxu0 %v209
    %v778 = vpop.f32.mrf.mxu0
    %v779 = vadd.f32 0.0, %v778
    %780 = vmatmul.f32.gmra.mxu0 %v212
    %v781 = vpop.f32.mrf.mxu0
    %v782 = vadd.f32 0.0, %v781
    %783 = vmatmul.f32.gmra.mxu0 %v215
    %v784 = vpop.f32.mrf.mxu0
    %v785 = vadd.f32 0.0, %v784
    %786 = vdwg.mxu0
    %v787 = vsub.f32 %v667, %v779
    %v788 = vsub.f32 %v670, %v782
    %v789 = vsub.f32 %v673, %v785
    %v790 = vmul.f32 %v787, %v787
    %v791 = vmul.f32 %v788, %v788
    %v792 = vmul.f32 %v789, %v789
    %v793 = vmul.f32 %v790, %v787
    %v794 = vmul.f32 %v791, %v788
    %v795 = vmul.f32 %v792, %v789
    %796 = vmatpush.msra.mxu0 0.0
    %797 = vmatpush.msra.mxu0 0.0
    %798 = vmatpush.msra.mxu0 0.0
    %799 = vmatpush.msra.mxu0 0.0
    %800 = vmatpush.msra.mxu0 0.0
    %801 = vmatpush.msra.mxu0 0.0
    %802 = vmatpush.msra.mxu0 0.0
    %803 = vmatpush.msra.mxu0 0.0
    %804 = vmatpush.msra.mxu0 0.0
    %805 = vmatpush.msra.mxu0 0.0
    %806 = vmatpush.msra.mxu0 0.0
    %807 = vmatpush.msra.mxu0 0.0
    %808 = vmatpush.msra.mxu0 0.0
    %809 = vmatpush.msra.mxu0 %v795
    %810 = vmatpush.msra.mxu0 %v794
    %811 = vmatpush.msra.mxu0 %v793
    %812 = vmatmul.f32.gmra.mxu0 %v677
    %v813 = vpop.f32.mrf.mxu0
    %v814 = vadd.f32 0.0, %v813
    %815 = vdwg.mxu0
    %v816 = vmul.f32 %v790, %v790
    %v817 = vmul.f32 %v791, %v791
    %v818 = vmul.f32 %v792, %v792
    %819 = vmatpush.msra.mxu0 0.0
    %820 = vmatpush.msra.mxu0 0.0
    %821 = vmatpush.msra.mxu0 0.0
    %822 = vmatpush.msra.mxu0 0.0
    %823 = vmatpush.msra.mxu0 0.0
    %824 = vmatpush.msra.mxu0 0.0
    %825 = vmatpush.msra.mxu0 0.0
    %826 = vmatpush.msra.mxu0 0.0
    %827 = vmatpush.msra.mxu0 0.0
    %828 = vmatpush.msra.mxu0 0.0
    %829 = vmatpush.msra.mxu0 0.0
    %830 = vmatpush.msra.mxu0 0.0
    %831 = vmatpush.msra.mxu0 0.0
    %832 = vmatpush.msra.mxu0 %v818
    %833 = vmatpush.msra.mxu0 %v817
    %834 = vmatpush.msra.mxu0 %v816
    %835 = vmatmul.f32.gmra.mxu0 %v677
    %v836 = vpop.f32.mrf.mxu0
    %v837 = vadd.f32 0.0, %v836
    %838 = vdwg.mxu0
    %v839 = vmul.f32 %v760, %v760
    %v840 = vmul.f32 %v839, %v760
    %v841 = vmul.f32 %v814, %v740
    %v842 = vrcp.pop %v840
    %v843 = vmul.f32 %v840, %v842
    %v844 = vsub.f32 1.0, %v843
    %v845 = vmul.f32 %v842, %v844
    %v846 = vadd.f32 %v842, %v845
    %vm847 = vweird.f32 %v840
    %vm848 = vweird.f32 %v842
    %vm849 = vmor %vm847, %vm848
    %v850 = vsel %vm849, %v842, %v846
    %v851 = vand.u32 2147483647, %v840
    %vm852 = vcmp.eq.f32.partialorder %v851, 8.507059e+37
    %v853 = vand.u32 %v840, 2147483648
    %v854 = vor.u32 1.1754944e-38, %v853
    %v855 = vsel %vm852, %v854, %v850
    %v856 = vmul.f32 %v841, %v855
    %v857 = vmul.f32 %v837, %v740
    %v858 = vmul.f32 %v840, %v760
    %v859 = vrcp.pop %v858
    %v860 = vmul.f32 %v858, %v859
    %v861 = vsub.f32 1.0, %v860
    %v862 = vmul.f32 %v859, %v861
    %v863 = vadd.f32 %v859, %v862
    %vm864 = vweird.f32 %v858
    %vm865 = vweird.f32 %v859
    %vm866 = vmor %vm864, %vm865
    %v867 = vsel %vm866, %v859, %v863
    %v868 = vand.u32 2147483647, %v858
    %vm869 = vcmp.eq.f32.partialorder %v868, 8.507059e+37
    %v870 = vand.u32 %v858, 2147483648
    %v871 = vor.u32 1.1754944e-38, %v870
    %v872 = vsel %vm869, %v871, %v867
    %v873 = vmul.f32 %v857, %v872
    %vm874 = vcmp.ne.f32.partialorder %v741, %v741
    %v875 = vsel %vm874, 0.0, %v741
    %v876 = vmax.f32 %v875, -3.4028235e+38
    %v877 = vmin.f32 %v876, 3.4028235e+38
    %vm878 = vcmp.ne.f32.partialorder %v747, %v747
    %v879 = vsel %vm878, 0.0, %v747
    %v880 = vmax.f32 %v879, -3.4028235e+38
    %v881 = vmin.f32 %v880, 3.4028235e+38
    %v882 = vadd.f32 %v881, 1e-06
    %v883 = vrsqrt.pop %v882
    %v884 = vmul.f32 %v883, %v882
    %v885 = vmul.f32 %v884, %v883
    %v886 = vmul.f32 0.5, %v885
    %v887 = vsub.f32 1.5, %v886
    %v888 = vmul.f32 %v883, %v887
    %v889 = vmul.f32 %v882, %v888
    %vm890 = vcmp.eq.f32.partialorder %v882, inf
    %v891 = vsel %vm890, %v882, %v889
    %vm892 = vcmp.eq.f32.partialorder %v882, 0.0
    %v893 = vand.u32 %v882, 2147483648
    %v894 = vsel %vm892, %v893, %v891
    %vm895 = vcmp.ne.f32.partialorder %v856, %v856
    %v896 = vsel %vm895, 0.0, %v856
    %v897 = vmax.f32 %v896, -3.4028235e+38
    %v898 = vmin.f32 %v897, 3.4028235e+38
    %vm899 = vcmp.ne.f32.partialorder %v873, %v873
    %v900 = vsel %vm899, 0.0, %v873
    %v901 = vmax.f32 %v900, -3.4028235e+38
    %v902 = vmin.f32 %v901, 3.4028235e+38
    %v903 = vld [vmem:[#allocation2] sm:$0xff]
    %v904 = vld [vmem:[#allocation2 + $0x8] sm:$0xff]
    %v905 = vld [vmem:[#allocation2 + $0x10] sm:$0xff]
    %v906 = vld [vmem:[#allocation2 + $0x18] sm:$0xff]
    %v907 = vld [vmem:[#allocation2 + $0x20] sm:$0xff]
    %v908 = vld [vmem:[#allocation2 + $0x28] sm:$0xff]
    %v909 = vld [vmem:[#allocation2 + $0x30] sm:$0xff]
    %v910 = vld [vmem:[#allocation2 + $0x38] sm:$0xff]
    %v911 = vld [vmem:[#allocation2 + $0x40] sm:$0xff]
    %v912 = vld [vmem:[#allocation2 + $0x48] sm:$0xff]
    %v913 = vld [vmem:[#allocation2 + $0x50] sm:$0xff]
    %v914 = vld [vmem:[#allocation2 + $0x58] sm:$0xff]
    %v915 = vld [vmem:[#allocation2 + $0x60] sm:$0xff]
    %v916 = vld [vmem:[#allocation2 + $0x68] sm:$0xff]
    %v917 = vld [vmem:[#allocation2 + $0x70] sm:$0xff]
    %v918 = vld [vmem:[#allocation2 + $0x78] sm:$0xff]
    %v919 = vld [vmem:[#allocation2 + $0x80] sm:$0xff]
    %v920 = vld [vmem:[#allocation2 + $0x88] sm:$0xff]
    %v921 = vld [vmem:[#allocation2 + $0x90] sm:$0xff]
    %v922 = vld [vmem:[#allocation2 + $0x98] sm:$0xff]
    %v923 = vld [vmem:[#allocation2 + $0xa0] sm:$0xff]
    %v924 = vld [vmem:[#allocation2 + $0xa8] sm:$0xff]
    %v925 = vld [vmem:[#allocation2 + $0xb0] sm:$0xff]
    %v926 = vld [vmem:[#allocation2 + $0xb8] sm:$0xff]
    %v927 = vld [vmem:[#allocation2 + $0xc0] sm:$0xff]
    %v928 = vld [vmem:[#allocation2 + $0xc8] sm:$0xff]
    %v929 = vld [vmem:[#allocation2 + $0xd0] sm:$0xff]
    %v930 = vld [vmem:[#allocation2 + $0xd8] sm:$0xff]
    %v931 = vld [vmem:[#allocation2 + $0xe0] sm:$0xff]
    %v932 = vld [vmem:[#allocation2 + $0xe8] sm:$0xff]
    %v933 = vld [vmem:[#allocation2 + $0xf0] sm:$0xff]
    %v934 = vld [vmem:[#allocation2 + $0xf8] sm:$0xff]
    %v935 = vld [vmem:[#allocation2 + $0x100] sm:$0xff]
    %v936 = vld [vmem:[#allocation2 + $0x108] sm:$0xff]
    %v937 = vld [vmem:[#allocation2 + $0x110] sm:$0xff]
    %v938 = vld [vmem:[#allocation2 + $0x118] sm:$0xff]
    %v939 = vld [vmem:[#allocation2 + $0x120] sm:$0xff]
    %v940 = vld [vmem:[#allocation2 + $0x128] sm:$0xff]
    %v941 = vld [vmem:[#allocation2 + $0x130] sm:$0xff]
    %v942 = vld [vmem:[#allocation2 + $0x138] sm:$0xff]
    %v944 = vsel %vm639, %v877, 0
    %946 = vmatpush.msra.mxu0 0.0
    %947 = vmatpush.msra.mxu0 0.0
    %948 = vmatpush.msra.mxu0 0.0
    %949 = vmatpush.msra.mxu0 0.0
    %950 = vmatpush.msra.mxu0 0.0
    %951 = vmatpush.msra.mxu0 0.0
    %952 = vmatpush.msra.mxu0 0.0
    %953 = vmatpush.msra.mxu0 0.0
    %954 = vmatpush.msra.mxu0 0.0
    %955 = vmatpush.msra.mxu0 0.0
    %956 = vmatpush.msra.mxu0 0.0
    %957 = vmatpush.msra.mxu0 0.0
    %958 = vmatpush.msra.mxu0 %v913
    %959 = vmatpush.msra.mxu0 %v911
    %960 = vmatpush.msra.mxu0 %v909
    %961 = vmatpush.msra.mxu0 %v907
    %962 = vmatmul.f32.gmra.mxu0 %v944
    %v963 = vpop.f32.mrf.mxu0
    %v964 = vadd.f32 0.0, %v963
    %965 = vdwg.mxu0
    %966 = vmatpush.msra.mxu0 0.0
    %967 = vmatpush.msra.mxu0 0.0
    %968 = vmatpush.msra.mxu0 0.0
    %969 = vmatpush.msra.mxu0 0.0
    %970 = vmatpush.msra.mxu0 0.0
    %971 = vmatpush.msra.mxu0 0.0
    %972 = vmatpush.msra.mxu0 0.0
    %973 = vmatpush.msra.mxu0 0.0
    %974 = vmatpush.msra.mxu0 0.0
    %975 = vmatpush.msra.mxu0 0.0
    %976 = vmatpush.msra.mxu0 0.0
    %977 = vmatpush.msra.mxu0 0.0
    %978 = vmatpush.msra.mxu0 %v914
    %979 = vmatpush.msra.mxu0 %v912
    %980 = vmatpush.msra.mxu0 %v910
    %981 = vmatpush.msra.mxu0 %v908
    %982 = vmatmul.f32.gmra.mxu0 %v944
    %v983 = vpop.f32.mrf.mxu0
    %v984 = vadd.f32 0.0, %v983
    %985 = vdwg.mxu0
    %v987 = vsel %vm291, %v191, 0
    %989 = vmatpush.msra.mxu0 0.0
    %990 = vmatpush.msra.mxu0 0.0
    %991 = vmatpush.msra.mxu0 0.0
    %992 = vmatpush.msra.mxu0 0.0
    %993 = vmatpush.msra.mxu0 0.0
    %994 = vmatpush.msra.mxu0 0.0
    %995 = vmatpush.msra.mxu0 0.0
    %996 = vmatpush.msra.mxu0 0.0
    %997 = vmatpush.msra.mxu0 0.0
    %998 = vmatpush.msra.mxu0 0.0
    %999 = vmatpush.msra.mxu0 0.0
    %1000 = vmatpush.msra.mxu0 0.0
    %1001 = vmatpush.msra.mxu0 0.0
    %1002 = vmatpush.msra.mxu0 0.0
    %1003 = vmatpush.msra.mxu0 %v905
    %1004 = vmatpush.msra.mxu0 %v903
    %1005 = vmatmul.f32.gmra.mxu0 %v987
    %v1006 = vpop.f32.mrf.mxu0
    %v1007 = vadd.f32 %v964, %v1006
    %1008 = vdwg.mxu0
    %1009 = vmatpush.msra.mxu0 0.0
    %1010 = vmatpush.msra.mxu0 0.0
    %1011 = vmatpush.msra.mxu0 0.0
    %1012 = vmatpush.msra.mxu0 0.0
    %1013 = vmatpush.msra.mxu0 0.0
    %1014 = vmatpush.msra.mxu0 0.0
    %1015 = vmatpush.msra.mxu0 0.0
    %1016 = vmatpush.msra.mxu0 0.0
    %1017 = vmatpush.msra.mxu0 0.0
    %1018 = vmatpush.msra.mxu0 0.0
    %1019 = vmatpush.msra.mxu0 0.0
    %1020 = vmatpush.msra.mxu0 0.0
    %1021 = vmatpush.msra.mxu0 0.0
    %1022 = vmatpush.msra.mxu0 0.0
    %1023 = vmatpush.msra.mxu0 %v906
    %1024 = vmatpush.msra.mxu0 %v904
    %1025 = vmatmul.f32.gmra.mxu0 %v987
    %v1026 = vpop.f32.mrf.mxu0
    %v1027 = vadd.f32 %v984, %v1026
    %1028 = vdwg.mxu0
    %v1030 = vsel %vm639, %v894, 0
    %1032 = vmatpush.msra.mxu0 0.0
    %1033 = vmatpush.msra.mxu0 0.0
    %1034 = vmatpush.msra.mxu0 0.0
    %1035 = vmatpush.msra.mxu0 0.0
    %1036 = vmatpush.msra.mxu0 0.0
    %1037 = vmatpush.msra.mxu0 0.0
    %1038 = vmatpush.msra.mxu0 0.0
    %1039 = vmatpush.msra.mxu0 0.0
    %1040 = vmatpush.msra.mxu0 0.0
    %1041 = vmatpush.msra.mxu0 0.0
    %1042 = vmatpush.msra.mxu0 0.0
    %1043 = vmatpush.msra.mxu0 0.0
    %1044 = vmatpush.msra.mxu0 %v921
    %1045 = vmatpush.msra.mxu0 %v919
    %1046 = vmatpush.msra.mxu0 %v917
    %1047 = vmatpush.msra.mxu0 %v915
    %1048 = vmatmul.f32.gmra.mxu0 %v1030
    %v1049 = vpop.f32.mrf.mxu0
    %v1050 = vadd.f32 0.0, %v1049
    %1051 = vdwg.mxu0
    %1052 = vmatpush.msra.mxu0 0.0
    %1053 = vmatpush.msra.mxu0 0.0
    %1054 = vmatpush.msra.mxu0 0.0
    %1055 = vmatpush.msra.mxu0 0.0
    %1056 = vmatpush.msra.mxu0 0.0
    %1057 = vmatpush.msra.mxu0 0.0
    %1058 = vmatpush.msra.mxu0 0.0
    %1059 = vmatpush.msra.mxu0 0.0
    %1060 = vmatpush.msra.mxu0 0.0
    %1061 = vmatpush.msra.mxu0 0.0
    %1062 = vmatpush.msra.mxu0 0.0
    %1063 = vmatpush.msra.mxu0 0.0
    %1064 = vmatpush.msra.mxu0 %v922
    %1065 = vmatpush.msra.mxu0 %v920
    %1066 = vmatpush.msra.mxu0 %v918
    %1067 = vmatpush.msra.mxu0 %v916
    %1068 = vmatmul.f32.gmra.mxu0 %v1030
    %v1069 = vpop.f32.mrf.mxu0
    %v1070 = vadd.f32 0.0, %v1069
    %1071 = vdwg.mxu0
    %v1072 = vadd.f32 %v1007, %v1050
    %v1073 = vadd.f32 %v1027, %v1070
    %v1075 = vsel %vm639, %v898, 0
    %1077 = vmatpush.msra.mxu0 0.0
    %1078 = vmatpush.msra.mxu0 0.0
    %1079 = vmatpush.msra.mxu0 0.0
    %1080 = vmatpush.msra.mxu0 0.0
    %1081 = vmatpush.msra.mxu0 0.0
    %1082 = vmatpush.msra.mxu0 0.0
    %1083 = vmatpush.msra.mxu0 0.0
    %1084 = vmatpush.msra.mxu0 0.0
    %1085 = vmatpush.msra.mxu0 0.0
    %1086 = vmatpush.msra.mxu0 0.0
    %1087 = vmatpush.msra.mxu0 0.0
    %1088 = vmatpush.msra.mxu0 0.0
    %1089 = vmatpush.msra.mxu0 %v929
    %1090 = vmatpush.msra.mxu0 %v927
    %1091 = vmatpush.msra.mxu0 %v925
    %1092 = vmatpush.msra.mxu0 %v923
    %1093 = vmatmul.f32.gmra.mxu0 %v1075
    %v1094 = vpop.f32.mrf.mxu0
    %v1095 = vadd.f32 0.0, %v1094
    %1096 = vdwg.mxu0
    %1097 = vmatpush.msra.mxu0 0.0
    %1098 = vmatpush.msra.mxu0 0.0
    %1099 = vmatpush.msra.mxu0 0.0
    %1100 = vmatpush.msra.mxu0 0.0
    %1101 = vmatpush.msra.mxu0 0.0
    %1102 = vmatpush.msra.mxu0 0.0
    %1103 = vmatpush.msra.mxu0 0.0
    %1104 = vmatpush.msra.mxu0 0.0
    %1105 = vmatpush.msra.mxu0 0.0
    %1106 = vmatpush.msra.mxu0 0.0
    %1107 = vmatpush.msra.mxu0 0.0
    %1108 = vmatpush.msra.mxu0 0.0
    %1109 = vmatpush.msra.mxu0 %v930
    %1110 = vmatpush.msra.mxu0 %v928
    %1111 = vmatpush.msra.mxu0 %v926
    %1112 = vmatpush.msra.mxu0 %v924
    %1113 = vmatmul.f32.gmra.mxu0 %v1075
    %v1114 = vpop.f32.mrf.mxu0
    %v1115 = vadd.f32 0.0, %v1114
    %1116 = vdwg.mxu0
    %v1117 = vadd.f32 %v1072, %v1095
    %v1118 = vadd.f32 %v1073, %v1115
    %v1120 = vsel %vm639, %v902, 0
    %1122 = vmatpush.msra.mxu0 0.0
    %1123 = vmatpush.msra.mxu0 0.0
    %1124 = vmatpush.msra.mxu0 0.0
    %1125 = vmatpush.msra.mxu0 0.0
    %1126 = vmatpush.msra.mxu0 0.0
    %1127 = vmatpush.msra.mxu0 0.0
    %1128 = vmatpush.msra.mxu0 0.0
    %1129 = vmatpush.msra.mxu0 0.0
    %1130 = vmatpush.msra.mxu0 0.0
    %1131 = vmatpush.msra.mxu0 0.0
    %1132 = vmatpush.msra.mxu0 0.0
    %1133 = vmatpush.msra.mxu0 0.0
    %1134 = vmatpush.msra.mxu0 %v937
    %1135 = vmatpush.msra.mxu0 %v935
    %1136 = vmatpush.msra.mxu0 %v933
    %1137 = vmatpush.msra.mxu0 %v931
    %1138 = vmatmul.f32.gmra.mxu0 %v1120
    %v1139 = vpop.f32.mrf.mxu0
    %v1140 = vadd.f32 0.0, %v1139
    %1141 = vdwg.mxu0
    %1142 = vmatpush.msra.mxu0 0.0
    %1143 = vmatpush.msra.mxu0 0.0
    %1144 = vmatpush.msra.mxu0 0.0
    %1145 = vmatpush.msra.mxu0 0.0
    %1146 = vmatpush.msra.mxu0 0.0
    %1147 = vmatpush.msra.mxu0 0.0
    %1148 = vmatpush.msra.mxu0 0.0
    %1149 = vmatpush.msra.mxu0 0.0
    %1150 = vmatpush.msra.mxu0 0.0
    %1151 = vmatpush.msra.mxu0 0.0
    %1152 = vmatpush.msra.mxu0 0.0
    %1153 = vmatpush.msra.mxu0 0.0
    %1154 = vmatpush.msra.mxu0 %v938
    %1155 = vmatpush.msra.mxu0 %v936
    %1156 = vmatpush.msra.mxu0 %v934
    %1157 = vmatpush.msra.mxu0 %v932
    %1158 = vmatmul.f32.gmra.mxu0 %v1120
    %v1159 = vpop.f32.mrf.mxu0
    %v1160 = vadd.f32 0.0, %v1159
    %1161 = vdwg.mxu0
    %v1162 = vadd.f32 %v1117, %v1140
    %v1163 = vadd.f32 %v1118, %v1160
    %v1164 = vld [vmem:[%s41] sm:$0x3]
    %v1166 = vperm.slane %v1164, 0
    %v1167 = vperm.slane %v1164, 1
    %1170 = vmatpush.msra.mxu0 0.0
    %1171 = vmatpush.msra.mxu0 0.0
    %1172 = vmatpush.msra.mxu0 0.0
    %1173 = vmatpush.msra.mxu0 0.0
    %1174 = vmatpush.msra.mxu0 0.0
    %1175 = vmatpush.msra.mxu0 0.0
    %1176 = vmatpush.msra.mxu0 0.0
    %1177 = vmatpush.msra.mxu0 0.0
    %1178 = vmatpush.msra.mxu0 0.0
    %1179 = vmatpush.msra.mxu0 0.0
    %1180 = vmatpush.msra.mxu0 0.0
    %1181 = vmatpush.msra.mxu0 0.0
    %1182 = vmatpush.msra.mxu0 0.0
    %1183 = vmatpush.msra.mxu0 0.0
    %1184 = vmatpush.msra.mxu0 %v941
    %1185 = vmatpush.msra.mxu0 %v939
    %1186 = vmatmul.f32.gmra.mxu0 %v402
    %v1187 = vpop.f32.mrf.mxu0
    %v1188 = vadd.f32 %v1166, %v1187
    %1189 = vdwg.mxu0
    %1190 = vmatpush.msra.mxu0 0.0
    %1191 = vmatpush.msra.mxu0 0.0
    %1192 = vmatpush.msra.mxu0 0.0
    %1193 = vmatpush.msra.mxu0 0.0
    %1194 = vmatpush.msra.mxu0 0.0
    %1195 = vmatpush.msra.mxu0 0.0
    %1196 = vmatpush.msra.mxu0 0.0
    %1197 = vmatpush.msra.mxu0 0.0
    %1198 = vmatpush.msra.mxu0 0.0
    %1199 = vmatpush.msra.mxu0 0.0
    %1200 = vmatpush.msra.mxu0 0.0
    %1201 = vmatpush.msra.mxu0 0.0
    %1202 = vmatpush.msra.mxu0 0.0
    %1203 = vmatpush.msra.mxu0 0.0
    %1204 = vmatpush.msra.mxu0 %v942
    %1205 = vmatpush.msra.mxu0 %v940
    %1206 = vmatmul.f32.gmra.mxu0 %v402
    %v1207 = vpop.f32.mrf.mxu0
    %v1208 = vadd.f32 %v1167, %v1207
    %1209 = vdwg.mxu0
    %v1210 = vperm.slane %v1188, 0
    %v1211 = vperm.slane %v1208, 0
    %v1212 = vadd.f32 %v1162, %v1210
    %v1213 = vadd.f32 %v1163, %v1211
    %vm1214 = vcmp.ge.f32.partialorder %v1212, 0.0
    %vm1215 = vcmp.ge.f32.partialorder %v1213, 0.0
    %v1216 = vmul.f32 %v1212, 0.1
    %v1217 = vmul.f32 %v1213, 0.1
    %v1218 = vsel %vm1214, %v1212, %v1216
    %v1219 = vsel %vm1215, %v1213, %v1217
    %v1220 = vld [vmem:[%s43] sm:$0xff]
    %v1221 = vld [vmem:[%s43 + $0x8] sm:$0xff]
    %v1222 = vld [vmem:[%s43 + $0x10] sm:$0xff]
    %v1223 = vld [vmem:[%s43 + $0x18] sm:$0xff]
    %v1224 = vld [vmem:[%s43 + $0x20] sm:$0xff]
    %v1225 = vld [vmem:[%s43 + $0x28] sm:$0xff]
    %v1226 = vld [vmem:[%s43 + $0x30] sm:$0xff]
    %v1227 = vld [vmem:[%s43 + $0x38] sm:$0xff]
    %v1228 = vld [vmem:[%s43 + $0x40] sm:$0xff]
    %v1229 = vld [vmem:[%s43 + $0x48] sm:$0xff]
    %v1230 = vld [vmem:[%s43 + $0x50] sm:$0xff]
    %v1231 = vld [vmem:[%s43 + $0x58] sm:$0xff]
    %v1232 = vld [vmem:[%s43 + $0x60] sm:$0xff]
    %v1233 = vld [vmem:[%s43 + $0x68] sm:$0xff]
    %v1234 = vld [vmem:[%s43 + $0x70] sm:$0xff]
    %v1235 = vld [vmem:[%s43 + $0x78] sm:$0xff]
    %v1236 = vld [vmem:[%s43 + $0x80] sm:$0xff]
    %v1237 = vld [vmem:[%s43 + $0x88] sm:$0xff]
    %v1238 = vld [vmem:[%s43 + $0x90] sm:$0xff]
    %v1239 = vld [vmem:[%s43 + $0x98] sm:$0xff]
    %v1240 = vld [vmem:[%s45] sm:$0x1]
    %v1242 = vperm.slane %v1240, 0
    %v1245 = vsel %vm639, %v1219, 0
    %1247 = vmatpush.msra.mxu0 %v1235
    %1248 = vmatpush.msra.mxu0 %v1234
    %1249 = vmatpush.msra.mxu0 %v1233
    %1250 = vmatpush.msra.mxu0 %v1232
    %1251 = vmatpush.msra.mxu0 %v1231
    %1252 = vmatpush.msra.mxu0 %v1230
    %1253 = vmatpush.msra.mxu0 %v1229
    %1254 = vmatpush.msra.mxu0 %v1228
    %1255 = vmatpush.msra.mxu0 %v1227
    %1256 = vmatpush.msra.mxu0 %v1226
    %1257 = vmatpush.msra.mxu0 %v1225
    %1258 = vmatpush.msra.mxu0 %v1224
    %1259 = vmatpush.msra.mxu0 %v1223
    %1260 = vmatpush.msra.mxu0 %v1222
    %1261 = vmatpush.msra.mxu0 %v1221
    %1262 = vmatpush.msra.mxu0 %v1220
    %1263 = vmatmul.f32.gmra.mxu0 %v1218
    %v1264 = vpop.f32.mrf.mxu0
    %v1265 = vadd.f32 %v1242, %v1264
    %1266 = vdwg.mxu0
    %1267 = vmatpush.msra.mxu0 0.0
    %1268 = vmatpush.msra.mxu0 0.0
    %1269 = vmatpush.msra.mxu0 0.0
    %1270 = vmatpush.msra.mxu0 0.0
    %1271 = vmatpush.msra.mxu0 0.0
    %1272 = vmatpush.msra.mxu0 0.0
    %1273 = vmatpush.msra.mxu0 0.0
    %1274 = vmatpush.msra.mxu0 0.0
    %1275 = vmatpush.msra.mxu0 0.0
    %1276 = vmatpush.msra.mxu0 0.0
    %1277 = vmatpush.msra.mxu0 0.0
    %1278 = vmatpush.msra.mxu0 0.0
    %1279 = vmatpush.msra.mxu0 %v1239
    %1280 = vmatpush.msra.mxu0 %v1238
    %1281 = vmatpush.msra.mxu0 %v1237
    %1282 = vmatpush.msra.mxu0 %v1236
    %1283 = vmatmul.f32.gmra.mxu0 %v1245
    %v1284 = vpop.f32.mrf.mxu0
    %v1285 = vadd.f32 %v1265, %v1284
    %1286 = vdwg.mxu0
    %v1287 = vld [vmem:[%s47] sm:$0x1]
    %v1288 = vld [vmem:[%s49] sm:$0x1]
    %v1289 = vsel %vm291, %v1285, 0.0
    %v1290 = vrot.slane %v1289, 4
    %v1291 = vadd.f32 %v1289, %v1290
    %v1292 = vrot.slane %v1291, 2
    %v1293 = vadd.f32 %v1291, %v1292
    %v1294 = vrot.slane %v1293, 1
    %v1295 = vadd.f32 %v1293, %v1294
    %v1296 = vrcp.pop 8.0
    %v1297 = vmul.f32 8.0, %v1296
    %v1298 = vsub.f32 1.0, %v1297
    %v1299 = vmul.f32 %v1296, %v1298
    %v1300 = vadd.f32 %v1296, %v1299
    %vm1301 = vweird.f32 %v1296
    %v1302 = vsel %vm1301, %v1296, %v1300
    %v1303 = vmul.f32 %v1295, %v1302
    %v1304 = vsub.f32 %v1285, %v1303
    %v1305 = vmul.f32 %v1304, %v1304
    %v1306 = vsel %vm291, %v1305, 0.0
    %v1307 = vrot.slane %v1306, 4
    %v1308 = vadd.f32 %v1306, %v1307
    %v1309 = vrot.slane %v1308, 2
    %v1310 = vadd.f32 %v1308, %v1309
    %v1311 = vrot.slane %v1310, 1
    %v1312 = vadd.f32 %v1310, %v1311
    %v1313 = vmul.f32 %v1312, %v1302
    %v1314 = vadd.f32 %v1313, 1e-05
    %v1315 = vrsqrt.pop %v1314
    %v1316 = vmul.f32 %v1315, %v1314
    %v1317 = vmul.f32 %v1316, %v1315
    %v1318 = vmul.f32 0.5, %v1317
    %v1319 = vsub.f32 1.5, %v1318
    %v1320 = vmul.f32 %v1315, %v1319
    %vm1321 = vweird.f32 %v1314
    %vm1322 = vweird.f32 %v1315
    %vm1323 = vmor %vm1321, %vm1322
    %v1324 = vsel %vm1323, %v1315, %v1320
    %v1325 = vmul.f32 %v1304, %v1324
    %v1327 = vperm.slane %v1287, 0
    %v1329 = vmul.f32 %v1325, %v1327
    %v1331 = vperm.slane %v1288, 0
    %v1333 = vadd.f32 %v1329, %v1331
    %1334 = vmatpush.msra.mxu0 0.0
    %1335 = vmatpush.msra.mxu0 0.0
    %1336 = vmatpush.msra.mxu0 0.0
    %1337 = vmatpush.msra.mxu0 0.0
    %1338 = vmatpush.msra.mxu0 0.0
    %1339 = vmatpush.msra.mxu0 0.0
    %1340 = vmatpush.msra.mxu0 0.0
    %1341 = vmatpush.msra.mxu0 0.0
    %1342 = vmatpush.msra.mxu0 0.0
    %1343 = vmatpush.msra.mxu0 0.0
    %1344 = vmatpush.msra.mxu0 0.0
    %1345 = vmatpush.msra.mxu0 0.0
    %1346 = vmatpush.msra.mxu0 0.0
    %1347 = vmatpush.msra.mxu0 0.0
    %1348 = vmatpush.msra.mxu0 0.0
    %1349 = vmatpush.msra.mxu0 %v1333
    %1350 = vmatmul.f32.gmra.mxu0 %v209
    %v1351 = vpop.f32.mrf.mxu0
    %v1352 = vadd.f32 0.0, %v1351
    %1353 = vmatmul.f32.gmra.mxu0 %v212
    %v1354 = vpop.f32.mrf.mxu0
    %v1355 = vadd.f32 0.0, %v1354
    %1356 = vmatmul.f32.gmra.mxu0 %v215
    %v1357 = vpop.f32.mrf.mxu0
    %v1358 = vadd.f32 0.0, %v1357
    %1359 = vdwg.mxu0
    %v1360 = vld [vmem:[%s51] sm:$0xff]
    %v1361 = vld [vmem:[%s51 + $0x8] sm:$0xff]
    %v1362 = vld [vmem:[%s51 + $0x10] sm:$0xff]
    %v1363 = vld [vmem:[%s51 + $0x18] sm:$0xff]
    %1364 = vmatpush.msra.mxu0 0.0
    %1365 = vmatpush.msra.mxu0 0.0
    %1366 = vmatpush.msra.mxu0 0.0
    %1367 = vmatpush.msra.mxu0 0.0
    %1368 = vmatpush.msra.mxu0 0.0
    %1369 = vmatpush.msra.mxu0 0.0
    %1370 = vmatpush.msra.mxu0 0.0
    %1371 = vmatpush.msra.mxu0 0.0
    %1372 = vmatpush.msra.mxu0 0.0
    %1373 = vmatpush.msra.mxu0 0.0
    %1374 = vmatpush.msra.mxu0 0.0
    %1375 = vmatpush.msra.mxu0 0.0
    %1376 = vmatpush.msra.mxu0 0.0
    %1377 = vmatpush.msra.mxu0 0.0
    %1378 = vmatpush.msra.mxu0 %v1363
    %1379 = vmatpush.msra.mxu0 %v1362
    %1380 = vmatmul.f32.gmra.mxu0 %v555
    %v1381 = vpop.f32.mrf.mxu0
    %v1382 = vadd.f32 0.0, %v1381
    %1383 = vmatmul.f32.gmra.mxu0 %v558
    %v1384 = vpop.f32.mrf.mxu0
    %v1385 = vadd.f32 0.0, %v1384
    %1386 = vmatmul.f32.gmra.mxu0 %v561
    %v1387 = vpop.f32.mrf.mxu0
    %v1388 = vadd.f32 0.0, %v1387
    %1389 = vdwg.mxu0
    %v1391 = vsel %vm291, %v1352, 0
    %v1394 = vsel %vm291, %v1355, 0
    %v1397 = vsel %vm291, %v1358, 0
    %1399 = vmatpush.msra.mxu0 0.0
    %1400 = vmatpush.msra.mxu0 0.0
    %1401 = vmatpush.msra.mxu0 0.0
    %1402 = vmatpush.msra.mxu0 0.0
    %1403 = vmatpush.msra.mxu0 0.0
    %1404 = vmatpush.msra.mxu0 0.0
    %1405 = vmatpush.msra.mxu0 0.0
    %1406 = vmatpush.msra.mxu0 0.0
    %1407 = vmatpush.msra.mxu0 0.0
    %1408 = vmatpush.msra.mxu0 0.0
    %1409 = vmatpush.msra.mxu0 0.0
    %1410 = vmatpush.msra.mxu0 0.0
    %1411 = vmatpush.msra.mxu0 0.0
    %1412 = vmatpush.msra.mxu0 0.0
    %1413 = vmatpush.msra.mxu0 %v1361
    %1414 = vmatpush.msra.mxu0 %v1360
    %1415 = vmatmul.f32.gmra.mxu0 %v1391
    %v1416 = vpop.f32.mrf.mxu0
    %v1417 = vadd.f32 %v1382, %v1416
    %1418 = vmatmul.f32.gmra.mxu0 %v1394
    %v1419 = vpop.f32.mrf.mxu0
    %v1420 = vadd.f32 %v1385, %v1419
    %1421 = vmatmul.f32.gmra.mxu0 %v1397
    %v1422 = vpop.f32.mrf.mxu0
    %v1423 = vadd.f32 %v1388, %v1422
    %1424 = vdwg.mxu0
    %v1425 = vld [vmem:[%s53] sm:$0x1]
    %v1427 = vperm.slane %v1425, 0
    %v1429 = vadd.f32 %v1417, %v1427
    %v1430 = vadd.f32 %v1420, %v1427
    %v1431 = vadd.f32 %v1423, %v1427
    %vm1432 = vcmp.ge.f32.partialorder %v1429, 0.0
    %vm1433 = vcmp.ge.f32.partialorder %v1430, 0.0
    %vm1434 = vcmp.ge.f32.partialorder %v1431, 0.0
    %v1435 = vmul.f32 %v1429, 0.1
    %v1436 = vmul.f32 %v1430, 0.1
    %v1437 = vmul.f32 %v1431, 0.1
    %v1438 = vsel %vm1432, %v1429, %v1435
    %v1439 = vsel %vm1433, %v1430, %v1436
    %v1440 = vsel %vm1434, %v1431, %v1437
    %v1441 = vld [vmem:[%s55] sm:$0xff]
    %v1442 = vld [vmem:[%s55 + $0x8] sm:$0xff]
    %v1443 = vld [vmem:[%s55 + $0x10] sm:$0xff]
    %v1444 = vld [vmem:[%s55 + $0x18] sm:$0xff]
    %v1445 = vld [vmem:[%s57] sm:$0x1]
    %v1447 = vperm.slane %v1445, 0
    %v1450 = vsel %vm639, %v1438, 0
    %v1453 = vsel %vm639, %v1439, 0
    %v1456 = vsel %vm639, %v1440, 0
    %1458 = vmatpush.msra.mxu0 0.0
    %1459 = vmatpush.msra.mxu0 0.0
    %1460 = vmatpush.msra.mxu0 0.0
    %1461 = vmatpush.msra.mxu0 0.0
    %1462 = vmatpush.msra.mxu0 0.0
    %1463 = vmatpush.msra.mxu0 0.0
    %1464 = vmatpush.msra.mxu0 0.0
    %1465 = vmatpush.msra.mxu0 0.0
    %1466 = vmatpush.msra.mxu0 0.0
    %1467 = vmatpush.msra.mxu0 0.0
    %1468 = vmatpush.msra.mxu0 0.0
    %1469 = vmatpush.msra.mxu0 0.0
    %1470 = vmatpush.msra.mxu0 %v1444
    %1471 = vmatpush.msra.mxu0 %v1443
    %1472 = vmatpush.msra.mxu0 %v1442
    %1473 = vmatpush.msra.mxu0 %v1441
    %1474 = vmatmul.f32.gmra.mxu0 %v1450
    %v1475 = vpop.f32.mrf.mxu0
    %v1476 = vadd.f32 %v1447, %v1475
    %1477 = vmatmul.f32.gmra.mxu0 %v1453
    %v1478 = vpop.f32.mrf.mxu0
    %v1479 = vadd.f32 %v1447, %v1478
    %1480 = vmatmul.f32.gmra.mxu0 %v1456
    %v1481 = vpop.f32.mrf.mxu0
    %v1482 = vadd.f32 %v1447, %v1481
    %1483 = vdwg.mxu0
    %v1485 = vsel %vm675, %v204, 0
    %1487 = vmatpush.msra.mxu0 0.0
    %1488 = vmatpush.msra.mxu0 0.0
    %1489 = vmatpush.msra.mxu0 0.0
    %1490 = vmatpush.msra.mxu0 0.0
    %1491 = vmatpush.msra.mxu0 0.0
    %1492 = vmatpush.msra.mxu0 0.0
    %1493 = vmatpush.msra.mxu0 0.0
    %1494 = vmatpush.msra.mxu0 0.0
    %1495 = vmatpush.msra.mxu0 0.0
    %1496 = vmatpush.msra.mxu0 0.0
    %1497 = vmatpush.msra.mxu0 0.0
    %1498 = vmatpush.msra.mxu0 0.0
    %1499 = vmatpush.msra.mxu0 0.0
    %1500 = vmatpush.msra.mxu0 %v1482
    %1501 = vmatpush.msra.mxu0 %v1479
    %1502 = vmatpush.msra.mxu0 %v1476
    %1503 = vmatmul.f32.gmra.mxu0 %v1485
    %v1504 = vpop.f32.mrf.mxu0
    %v1505 = vadd.f32 0.0, %v1504
    %1506 = vdwg.mxu0
    %v1507 = vld [vmem:[%s59] sm:$0xff]
    %v1508 = vld [vmem:[%s59 + $0x8] sm:$0xff]
    %v1509 = vld [vmem:[%s59 + $0x10] sm:$0xff]
    %v1510 = vld [vmem:[%s59 + $0x18] sm:$0xff]
    %v1511 = vld [vmem:[%s59 + $0x20] sm:$0xff]
    %v1512 = vld [vmem:[%s59 + $0x28] sm:$0xff]
    %v1513 = vld [vmem:[%s59 + $0x30] sm:$0xff]
    %v1514 = vld [vmem:[%s59 + $0x38] sm:$0xff]
    %v1516 = vsel %vm639, %v1505, 0
    %1518 = vmatpush.msra.mxu0 0.0
    %1519 = vmatpush.msra.mxu0 0.0
    %1520 = vmatpush.msra.mxu0 0.0
    %1521 = vmatpush.msra.mxu0 0.0
    %1522 = vmatpush.msra.mxu0 0.0
    %1523 = vmatpush.msra.mxu0 0.0
    %1524 = vmatpush.msra.mxu0 0.0
    %1525 = vmatpush.msra.mxu0 0.0
    %1526 = vmatpush.msra.mxu0 0.0
    %1527 = vmatpush.msra.mxu0 0.0
    %1528 = vmatpush.msra.mxu0 0.0
    %1529 = vmatpush.msra.mxu0 0.0
    %1530 = vmatpush.msra.mxu0 %v1512
    %1531 = vmatpush.msra.mxu0 %v1511
    %1532 = vmatpush.msra.mxu0 %v1510
    %1533 = vmatpush.msra.mxu0 %v1509
    %1534 = vmatmul.f32.gmra.mxu0 %v1516
    %v1535 = vpop.f32.mrf.mxu0
    %v1536 = vadd.f32 0.0, %v1535
    %1537 = vdwg.mxu0
    %v1538 = vsel %vm291, %v192, 0
    %1540 = vmatpush.msra.mxu0 0.0
    %1541 = vmatpush.msra.mxu0 0.0
    %1542 = vmatpush.msra.mxu0 0.0
    %1543 = vmatpush.msra.mxu0 0.0
    %1544 = vmatpush.msra.mxu0 0.0
    %1545 = vmatpush.msra.mxu0 0.0
    %1546 = vmatpush.msra.mxu0 0.0
    %1547 = vmatpush.msra.mxu0 0.0
    %1548 = vmatpush.msra.mxu0 0.0
    %1549 = vmatpush.msra.mxu0 0.0
    %1550 = vmatpush.msra.mxu0 0.0
    %1551 = vmatpush.msra.mxu0 0.0
    %1552 = vmatpush.msra.mxu0 0.0
    %1553 = vmatpush.msra.mxu0 0.0
    %1554 = vmatpush.msra.mxu0 %v1508
    %1555 = vmatpush.msra.mxu0 %v1507
    %1556 = vmatmul.f32.gmra.mxu0 %v1538
    %v1557 = vpop.f32.mrf.mxu0
    %v1558 = vadd.f32 %v1536, %v1557
    %1559 = vdwg.mxu0
    %v1560 = vld [vmem:[%s61] sm:$0x1]
    %1561 = vmatpush.msra.mxu0 0.0
    %1562 = vmatpush.msra.mxu0 0.0
    %1563 = vmatpush.msra.mxu0 0.0
    %1564 = vmatpush.msra.mxu0 0.0
    %1565 = vmatpush.msra.mxu0 0.0
    %1566 = vmatpush.msra.mxu0 0.0
    %1567 = vmatpush.msra.mxu0 0.0
    %1568 = vmatpush.msra.mxu0 0.0
    %1569 = vmatpush.msra.mxu0 0.0
    %1570 = vmatpush.msra.mxu0 0.0
    %1571 = vmatpush.msra.mxu0 0.0
    %1572 = vmatpush.msra.mxu0 0.0
    %1573 = vmatpush.msra.mxu0 0.0
    %1574 = vmatpush.msra.mxu0 0.0
    %1575 = vmatpush.msra.mxu0 %v1514
    %1576 = vmatpush.msra.mxu0 %v1513
    %1577 = vmatmul.f32.gmra.mxu0 %v402
    %v1578 = vpop.f32.mrf.mxu0
    %v1579 = vadd.f32 %v1560, %v1578
    %1580 = vdwg.mxu0
    %v1581 = vperm.slane %v1579, 0
    %v1582 = vadd.f32 %v1558, %v1581
    %vm1583 = vcmp.ge.f32.partialorder %v1582, 0.0
    %v1584 = vmul.f32 %v1582, 0.1
    %v1585 = vsel %vm1583, %v1582, %v1584
    %v1586 = vld [vmem:[%s63] sm:$0xff]
    %v1587 = vld [vmem:[%s63 + $0x8] sm:$0xff]
    %v1588 = vld [vmem:[%s63 + $0x10] sm:$0xff]
    %v1589 = vld [vmem:[%s63 + $0x18] sm:$0xff]
    %v1590 = vld [vmem:[%s63 + $0x20] sm:$0xff]
    %v1591 = vld [vmem:[%s63 + $0x28] sm:$0xff]
    %v1592 = vld [vmem:[%s63 + $0x30] sm:$0xff]
    %v1593 = vld [vmem:[%s63 + $0x38] sm:$0xff]
    %v1594 = vld [vmem:[%s65] sm:$0x1]
    %v1596 = vperm.slane %v1594, 0
    %v1599 = vsel %vm449, %v1585, 0
    %1601 = vmatpush.msra.mxu0 0.0
    %1602 = vmatpush.msra.mxu0 0.0
    %1603 = vmatpush.msra.mxu0 0.0
    %1604 = vmatpush.msra.mxu0 0.0
    %1605 = vmatpush.msra.mxu0 0.0
    %1606 = vmatpush.msra.mxu0 0.0
    %1607 = vmatpush.msra.mxu0 0.0
    %1608 = vmatpush.msra.mxu0 0.0
    %1609 = vmatpush.msra.mxu0 %v1593
    %1610 = vmatpush.msra.mxu0 %v1592
    %1611 = vmatpush.msra.mxu0 %v1591
    %1612 = vmatpush.msra.mxu0 %v1590
    %1613 = vmatpush.msra.mxu0 %v1589
    %1614 = vmatpush.msra.mxu0 %v1588
    %1615 = vmatpush.msra.mxu0 %v1587
    %1616 = vmatpush.msra.mxu0 %v1586
    %1617 = vmatmul.f32.gmra.mxu0 %v1599
    %v1618 = vpop.f32.mrf.mxu0
    %v1619 = vadd.f32 %v1596, %v1618
    %1620 = vdwg.mxu0
    %v1621 = vld [vmem:[%s67] sm:$0x1]
    %v1622 = vld [vmem:[%s69] sm:$0x1]
    %vm1623 = vcmask 128000
    %v1624 = vsel %vm1623, %v1619, 0.0
    %v1625 = vrot.slane %v1624, 4
    %v1626 = vadd.f32 %v1624, %v1625
    %v1627 = vrot.slane %v1626, 2
    %v1628 = vadd.f32 %v1626, %v1627
    %v1629 = vrot.slane %v1628, 1
    %v1630 = vadd.f32 %v1628, %v1629
    %v1631 = vrcp.pop 6.0
    %v1632 = vmul.f32 6.0, %v1631
    %v1633 = vsub.f32 1.0, %v1632
    %v1634 = vmul.f32 %v1631, %v1633
    %v1635 = vadd.f32 %v1631, %v1634
    %vm1636 = vweird.f32 %v1631
    %v1637 = vsel %vm1636, %v1631, %v1635
    %v1638 = vmul.f32 %v1630, %v1637
    %v1639 = vsub.f32 %v1619, %v1638
    %v1640 = vmul.f32 %v1639, %v1639
    %v1641 = vsel %vm1623, %v1640, 0.0
    %v1642 = vrot.slane %v1641, 4
    %v1643 = vadd.f32 %v1641, %v1642
    %v1644 = vrot.slane %v1643, 2
    %v1645 = vadd.f32 %v1643, %v1644
    %v1646 = vrot.slane %v1645, 1
    %v1647 = vadd.f32 %v1645, %v1646
    %v1648 = vmul.f32 %v1647, %v1637
    %v1649 = vadd.f32 %v1648, 1e-05
    %v1650 = vrsqrt.pop %v1649
    %v1651 = vmul.f32 %v1650, %v1649
    %v1652 = vmul.f32 %v1651, %v1650
    %v1653 = vmul.f32 0.5, %v1652
    %v1654 = vsub.f32 1.5, %v1653
    %v1655 = vmul.f32 %v1650, %v1654
    %vm1656 = vweird.f32 %v1649
    %vm1657 = vweird.f32 %v1650
    %vm1658 = vmor %vm1656, %vm1657
    %v1659 = vsel %vm1658, %v1650, %v1655
    %v1660 = vmul.f32 %v1639, %v1659
    %v1662 = vperm.slane %v1621, 0
    %v1664 = vmul.f32 %v1660, %v1662
    %v1666 = vperm.slane %v1622, 0
    %v1668 = vadd.f32 %v1664, %v1666
    %v1669 = vsel %vm291, %v1333, 0.0
    %v1670 = vrot.slane %v1669, 4
    %v1671 = vadd.f32 %v1669, %v1670
    %v1672 = vrot.slane %v1671, 2
    %v1673 = vadd.f32 %v1671, %v1672
    %v1674 = vrot.slane %v1673, 1
    %v1675 = vadd.f32 %v1673, %v1674
    %v1676 = vmul.f32 %v1675, %v1302
    %v1677 = vsel %vm1623, %v1668, 0.0
    %v1678 = vrot.slane %v1677, 4
    %v1679 = vadd.f32 %v1677, %v1678
    %v1680 = vrot.slane %v1679, 2
    %v1681 = vadd.f32 %v1679, %v1680
    %v1682 = vrot.slane %v1681, 1
    %v1683 = vadd.f32 %v1681, %v1682
    %v1684 = vmul.f32 %v1683, %v1637
    %v1685 = vld [vmem:[%s71] sm:$0xff]
    %v1686 = vld [vmem:[%s71 + $0x8] sm:$0xff]
    %v1687 = vld [vmem:[%s71 + $0x10] sm:$0xff]
    %v1688 = vld [vmem:[%s71 + $0x18] sm:$0xff]
    %v1689 = vld [vmem:[%s71 + $0x20] sm:$0xff]
    %v1690 = vld [vmem:[%s71 + $0x28] sm:$0xff]
    %v1692 = vsel %vm291, %v1676, 0
    %1694 = vmatpush.msra.mxu0 0.0
    %1695 = vmatpush.msra.mxu0 0.0
    %1696 = vmatpush.msra.mxu0 0.0
    %1697 = vmatpush.msra.mxu0 0.0
    %1698 = vmatpush.msra.mxu0 0.0
    %1699 = vmatpush.msra.mxu0 0.0
    %1700 = vmatpush.msra.mxu0 0.0
    %1701 = vmatpush.msra.mxu0 0.0
    %1702 = vmatpush.msra.mxu0 0.0
    %1703 = vmatpush.msra.mxu0 0.0
    %1704 = vmatpush.msra.mxu0 0.0
    %1705 = vmatpush.msra.mxu0 0.0
    %1706 = vmatpush.msra.mxu0 0.0
    %1707 = vmatpush.msra.mxu0 0.0
    %1708 = vmatpush.msra.mxu0 %v1688
    %1709 = vmatpush.msra.mxu0 %v1687
    %1710 = vmatmul.f32.gmra.mxu0 %v1692
    %v1711 = vpop.f32.mrf.mxu0
    %v1712 = vadd.f32 0.0, %v1711
    %1713 = vdwg.mxu0
    %1714 = vmatpush.msra.mxu0 0.0
    %1715 = vmatpush.msra.mxu0 0.0
    %1716 = vmatpush.msra.mxu0 0.0
    %1717 = vmatpush.msra.mxu0 0.0
    %1718 = vmatpush.msra.mxu0 0.0
    %1719 = vmatpush.msra.mxu0 0.0
    %1720 = vmatpush.msra.mxu0 0.0
    %1721 = vmatpush.msra.mxu0 0.0
    %1722 = vmatpush.msra.mxu0 0.0
    %1723 = vmatpush.msra.mxu0 0.0
    %1724 = vmatpush.msra.mxu0 0.0
    %1725 = vmatpush.msra.mxu0 0.0
    %1726 = vmatpush.msra.mxu0 0.0
    %1727 = vmatpush.msra.mxu0 0.0
    %1728 = vmatpush.msra.mxu0 %v1686
    %1729 = vmatpush.msra.mxu0 %v1685
    %1730 = vmatmul.f32.gmra.mxu0 %v402
    %v1731 = vpop.f32.mrf.mxu0
    %v1732 = vadd.f32 %v1712, %v1731
    %1733 = vdwg.mxu0
    %v1735 = vsel %vm291, %v1684, 0
    %1737 = vmatpush.msra.mxu0 0.0
    %1738 = vmatpush.msra.mxu0 0.0
    %1739 = vmatpush.msra.mxu0 0.0
    %1740 = vmatpush.msra.mxu0 0.0
    %1741 = vmatpush.msra.mxu0 0.0
    %1742 = vmatpush.msra.mxu0 0.0
    %1743 = vmatpush.msra.mxu0 0.0
    %1744 = vmatpush.msra.mxu0 0.0
    %1745 = vmatpush.msra.mxu0 0.0
    %1746 = vmatpush.msra.mxu0 0.0
    %1747 = vmatpush.msra.mxu0 0.0
    %1748 = vmatpush.msra.mxu0 0.0
    %1749 = vmatpush.msra.mxu0 0.0
    %1750 = vmatpush.msra.mxu0 0.0
    %1751 = vmatpush.msra.mxu0 %v1690
    %1752 = vmatpush.msra.mxu0 %v1689
    %1753 = vmatmul.f32.gmra.mxu0 %v1735
    %v1754 = vpop.f32.mrf.mxu0
    %v1755 = vadd.f32 0.0, %v1754
    %1756 = vdwg.mxu0
    %v1757 = vadd.f32 %v1732, %v1755
    %v1758 = vld [vmem:[%s73] sm:$0x1]
    %v1759 = vadd.f32 %v1757, %v1758
    %vm1760 = vcmp.ge.f32.partialorder %v1759, 0.0
    %v1761 = vmul.f32 %v1759, 0.1
    %v1762 = vsel %vm1760, %v1759, %v1761
    %v1763 = vld [vmem:[%s75] sm:$0xff]
    %v1764 = vld [vmem:[%s75 + $0x8] sm:$0xff]
    %v1765 = vld [vmem:[%s75 + $0x10] sm:$0xff]
    %v1766 = vld [vmem:[%s75 + $0x18] sm:$0xff]
    %v1767 = vld [vmem:[%s75 + $0x20] sm:$0xff]
    %v1768 = vld [vmem:[%s75 + $0x28] sm:$0xff]
    %v1769 = vld [vmem:[%s77] sm:$0x1]
    %vm1770 = vcmask 392192
    %v1772 = vsel %vm1770, %v1762, 0
    %1774 = vmatpush.msra.mxu0 0.0
    %1775 = vmatpush.msra.mxu0 0.0
    %1776 = vmatpush.msra.mxu0 0.0
    %1777 = vmatpush.msra.mxu0 0.0
    %1778 = vmatpush.msra.mxu0 0.0
    %1779 = vmatpush.msra.mxu0 0.0
    %1780 = vmatpush.msra.mxu0 0.0
    %1781 = vmatpush.msra.mxu0 0.0
    %1782 = vmatpush.msra.mxu0 0.0
    %1783 = vmatpush.msra.mxu0 0.0
    %1784 = vmatpush.msra.mxu0 %v1768
    %1785 = vmatpush.msra.mxu0 %v1767
    %1786 = vmatpush.msra.mxu0 %v1766
    %1787 = vmatpush.msra.mxu0 %v1765
    %1788 = vmatpush.msra.mxu0 %v1764
    %1789 = vmatpush.msra.mxu0 %v1763
    %1790 = vmatmul.f32.gmra.mxu0 %v1772
    %v1791 = vpop.f32.mrf.mxu0
    %v1792 = vadd.f32 %v1769, %v1791
    %1793 = vdwg.mxu0
    %v1794 = vmul.f32 %v1792, %v1792
    %vm1795 = vcmask 122880
    %v1796 = vsel %vm1795, %v1794, 0.0
    %1797 = vadd.xlane.f32.xlu0 %v1796
    %v1798 = vpop.xlane.xlu0 %1797
    %v1799 = vrcp.pop 16.0
    %v1800 = vmul.f32 16.0, %v1799
    %v1801 = vsub.f32 1.0, %v1800
    %v1802 = vmul.f32 %v1799, %v1801
    %v1803 = vadd.f32 %v1799, %v1802
    %vm1804 = vweird.f32 %v1799
    %v1805 = vsel %vm1804, %v1799, %v1803
    %v1806 = vmul.f32 %v1798, %v1805
    %v1807 = vadd.f32 %v1806, 1.1920929e-07
    %v1808 = vrsqrt.pop %v1807
    %v1809 = vmul.f32 %v1808, %v1807
    %v1810 = vmul.f32 %v1809, %v1808
    %v1811 = vmul.f32 0.5, %v1810
    %v1812 = vsub.f32 1.5, %v1811
    %v1813 = vmul.f32 %v1808, %v1812
    %vm1814 = vweird.f32 %v1807
    %vm1815 = vweird.f32 %v1808
    %vm1816 = vmor %vm1814, %vm1815
    %v1817 = vsel %vm1816, %v1808, %v1813
    %v1818 = vmul.f32 %v1792, %v1817
    %v1819 = vld [vmem:[%s79] sm:$0x1]
    %v1820 = vmul.f32 %v1818, %v1819
    %1821 = vst.msk [vmem:[#allocation5] sm:$0xff] %vm291, %v1333
    %1822 = vst.msk [vmem:[#allocation6] sm:$0x3f] %vm1623, %v1668
    %1823 = vst.msk [vmem:[%s85] sm:$0xff] %vm291, %v547
    %1824 = vst.msk [vmem:[%s85 + $0x8] sm:$0xff] %vm291, %v548
    %1825 = vst.msk [vmem:[%s85 + $0x10] sm:$0xff] %vm291, %v549
    %1826 = vst.msk [vmem:[#allocation8] sm:$0x1] %vm1795, %v1820
    // Predicated region
    $region166: #{block_forward.1} parent=1 // pred_check
      _
    $region167: #{block_forward.1} parent=1 // pred_check_branch
      %1828 = sbr.rel (0) target = $region169
    $region168: #{block_forward.1} parent=1 // pred_region
      %1830 = vsyncadd [#allocation4], 0
      %s1832 = sshll.u32 [#allocation5], 4
      %s1833 = int_to_ptr.vmem [resolvable:$true] %s1832
      %s1834 = sshll.u32 %s81, 4
      %s1835 = int_to_ptr.hbm [resolvable:$true] %s1834
      %1837 = dma.vmem_to_hbm [thread:$0]  %s1833, 128, %s1835, [#allocation4]
    $region169: #{block_forward.1} parent=1 // pred_fallthru
      _
    // Predicated region
    $region170: #{block_forward.1} parent=1 // pred_check
      _
    $region171: #{block_forward.1} parent=1 // pred_check_branch
      %1839 = sbr.rel (0) target = $region173
    $region172: #{block_forward.1} parent=1 // pred_region
      %1841 = vsyncadd [#allocation7], 0
      %s1843 = sshll.u32 [#allocation6], 4
      %s1844 = int_to_ptr.vmem [resolvable:$true] %s1843
      %s1845 = sshll.u32 %s83, 4
      %s1846 = int_to_ptr.hbm [resolvable:$true] %s1845
      %1848 = dma.vmem_to_hbm [thread:$0]  %s1844, 128, %s1846, [#allocation7]
    $region173: #{block_forward.1} parent=1 // pred_fallthru
      _
    // Predicated region
    $region174: #{block_forward.1} parent=1 // pred_check
      _
    $region175: #{block_forward.1} parent=1 // pred_check_branch
      %1850 = sbr.rel (0) target = $region177
    $region176: #{block_forward.1} parent=1 // pred_region
      _
    $region177: #{block_forward.1} parent=1 // pred_fallthru
      _
    // Predicated region
    $region178: #{block_forward.1} parent=1 // pred_check
      _
    $region179: #{block_forward.1} parent=1 // pred_check_branch
      %1852 = sbr.rel (0) target = $region181
    $region180: #{block_forward.1} parent=1 // pred_region
      %1854 = vsyncadd [#allocation7], 0
      %s1856 = sshll.u32 [#allocation8], 4
      %s1857 = int_to_ptr.vmem [resolvable:$true] %s1856
      %s1858 = sshll.u32 %s87, 4
      %s1859 = int_to_ptr.hbm [resolvable:$true] %s1858
      %1861 = dma.vmem_to_hbm [thread:$0]  %s1857, 16, %s1859, [#allocation7]
    $region181: #{block_forward.1} parent=1 // pred_fallthru
      _
    // Predicated region
    $region182: #{block_forward.1} parent=1 // pred_check
      _
    $region183: #{block_forward.1} parent=1 // pred_check_branch
      %1863 = sbr.rel (0) target = $region185
    $region184: #{block_forward.1} parent=1 // pred_region
      %1865 = dma.done [#allocation4], 128
    $region185: #{block_forward.1} parent=1 // pred_fallthru
      _
    // Predicated region
    $region186: #{block_forward.1} parent=1 // pred_check
      _
    $region187: #{block_forward.1} parent=1 // pred_check_branch
      %1867 = sbr.rel (0) target = $region189
    $region188: #{block_forward.1} parent=1 // pred_region
      %1869 = dma.done [#allocation7], 128
    $region189: #{block_forward.1} parent=1 // pred_fallthru
      _
    // Predicated region
    $region190: #{block_forward.1} parent=1 // pred_check
      _
    $region191: #{block_forward.1} parent=1 // pred_check_branch
      %1871 = sbr.rel (0) target = $region193
    $region192: #{block_forward.1} parent=1 // pred_region
      _
    $region193: #{block_forward.1} parent=1 // pred_fallthru
      _
    // Predicated region
    $region194: #{block_forward.1} parent=1 // pred_check
      _
    $region195: #{block_forward.1} parent=1 // pred_check_branch
      %1873 = sbr.rel (0) target = $region197
    $region196: #{block_forward.1} parent=1 // pred_region
      %1875 = dma.done [#allocation7], 16
    $region197: #{block_forward.1} parent=1 // pred_fallthru
      _
    %1876 = vsyncpa [#allocation3], 1
    %1877 = vsyncpa [#allocation4], 1
    %1878 = vsyncpa [#allocation7], 1

</llo_original>
